<compile_context>
chip_gen: v7x
topology: tpu7x:2x2x1
jax: 0.10.0
libtpu: 0.0.40
codegen_flags: <defaults>
</compile_context>

<pallas_src>
import functools

import numpy as np
import jax
import jax.numpy as jnp
from jax.experimental import pallas as pl
from jax.experimental.pallas import tpu as pltpu


def _round_up(x, m):
    return ((x + m - 1) // m) * m


def _logreg_kernel(d_idx_ref, p_idx_ref, emb_ref, w_ref, b_ref, o_ref,
                   pooled_ref, *, set_size, unroll_limit):
    """One (batch-tile, vocab-chunk) grid step.

    d_idx_ref/p_idx_ref: (TB, L) int32 code ids for this batch tile.
    emb_ref:   (VC, E_pad) bf16 vocab chunk of the frozen embedding table.
    w_ref:     (2*E_pad, C_pad) f32 transposed linear weight [diag; proc].
    b_ref:     (1, C_pad) f32 bias.
    o_ref:     (TB, C_pad) f32 logits, written only on the last vocab chunk.
    pooled_ref:(2*TB, E_pad) f32 scratch accumulator; rows [0:TB] diag,
               rows [TB:2TB] proc; persists across the vocab grid axis.
    """
    k = pl.program_id(1)
    tb, num_codes = d_idx_ref.shape
    vc = emb_ref.shape[0]

    @pl.when(k == 0)
    def _init():
        pooled_ref[...] = jnp.zeros_like(pooled_ref)

    d_idx = d_idx_ref[...]
    p_idx = p_idx_ref[...]
    base = k * vc
    lane_iota = jax.lax.broadcasted_iota(jnp.int32, (tb, vc), 1) + base

    # Per-row code-count matrix restricted to this vocab chunk.  Counts are
    # small exact integers, so bf16 is exact (wrapper asserts L <= 256) and is
    # the MXU-native input dtype.
    def add_code(col, counts):
        return counts + (col == lane_iota).astype(jnp.bfloat16)

    zeros = jnp.zeros((tb, vc), jnp.bfloat16)
    if num_codes <= unroll_limit:
        cd, cp = zeros, zeros
        for j in range(num_codes):               # static unroll for small L
            cd = add_code(d_idx[:, j:j + 1], cd)
            cp = add_code(p_idx[:, j:j + 1], cp)
    else:
        def body(j, carry):
            cd, cp = carry
            dcol = jax.lax.dynamic_slice_in_dim(d_idx, j, 1, axis=1)
            pcol = jax.lax.dynamic_slice_in_dim(p_idx, j, 1, axis=1)
            return add_code(dcol, cd), add_code(pcol, cp)
        cd, cp = jax.lax.fori_loop(0, num_codes, body, (zeros, zeros),
                                   unroll=8)
    # TODO(synk): once VOC >> E, a scalar-prefetch + DMA row-gather from an
    # HBM-resident table (O(L*E) bytes) beats this O(L*VC) one-hot build.

    # Stack diag/proc counts to 2*TB rows so one dot fills the 256-wide MXU.
    counts = jnp.concatenate([cd, cp], axis=0)            # (2*TB, VC) bf16
    pooled_ref[...] += jnp.dot(counts, emb_ref[...],
                               preferred_element_type=jnp.float32)

    @pl.when(k == pl.num_programs(1) - 1)
    def _finalize():
        inv_s = jnp.float32(1.0 / set_size)
        pooled = pooled_ref[...] * inv_s                  # (2*TB, E_pad) f32
        feat = jnp.concatenate([pooled[:tb], pooled[tb:]], axis=1)  # (TB,2E_pad)
        o_ref[...] = (jnp.dot(feat, w_ref[...],
                              preferred_element_type=jnp.float32)
                      + b_ref[...])


def embedded_logreg_forward(diag_idx, proc_idx, embedding, weight, bias, *,
                            batch_tile=128, vocab_tile=256,
                            emb_dtype=jnp.bfloat16, unroll_limit=64):
    """diag_idx/proc_idx: (B, V, S) int32; embedding: (vocab, E) f32 (frozen);
    weight: (C, 2E) f32 (PyTorch Linear layout); bias: (C,) f32.
    Returns logits (B, C) f32.

    Assumes a dense, uniform (B, V, S) index tensor (all visits have the same
    set size S), out-of-range indices never appear, and no padding_idx row is
    special-cased.
    """
    B, V, S = diag_idx.shape
    voc, E = embedding.shape
    C = weight.shape[0]
    L = V * S
    assert L <= 256, "bf16 count accumulation requires V*S <= 256 for exactness"

    e_pad = _round_up(E, 128)
    c_pad = _round_up(C, 128)

    # Batch tile: multiple of 8 sublanes; aim for >= 2 grid steps so both v7x
    # TensorCores get work on the 'parallel' axis.
    b8 = _round_up(B, 8)
    tb = min(batch_tile, max(8, _round_up(max(b8 // 2, 1), 8)))
    b_pad = _round_up(B, tb)

    # Vocab chunk: multiple of 128 lanes; reduction axis over chunks.
    vc = min(_round_up(vocab_tile, 128), _round_up(voc, 128))
    voc_pad = _round_up(voc, vc)

    d_idx = diag_idx.reshape(B, L).astype(jnp.int32)
    p_idx = proc_idx.reshape(B, L).astype(jnp.int32)
    if b_pad != B:
        pad = ((0, b_pad - B), (0, 0))
        d_idx = jnp.pad(d_idx, pad)   # padded rows -> code 0; sliced off below
        p_idx = jnp.pad(p_idx, pad)

    emb = jnp.pad(embedding.astype(jnp.float32),
                  ((0, voc_pad - voc), (0, e_pad - E))).astype(emb_dtype)

    w_t = weight.T.astype(jnp.float32)                    # (2E, C)
    w_d = jnp.pad(w_t[:E], ((0, e_pad - E), (0, c_pad - C)))
    w_p = jnp.pad(w_t[E:], ((0, e_pad - E), (0, c_pad - C)))
    w = jnp.concatenate([w_d, w_p], axis=0)               # (2*E_pad, C_pad)
    b2 = jnp.pad(bias.astype(jnp.float32), (0, c_pad - C)).reshape(1, c_pad)

    # Scoped-VMEM budget sized from the actually-resident buffers (+ headroom).
    ebytes = np.dtype(emb_dtype).itemsize
    resident = (2 * (tb * L * 4) * 2            # d_idx + p_idx, double-buffered
                + vc * e_pad * ebytes * 2       # emb chunk, double-buffered
                + 2 * e_pad * c_pad * 4 * 2     # weight (constant block)
                + c_pad * 4 * 2                 # bias
                + tb * c_pad * 4 * 2            # output tile
                + 2 * tb * e_pad * 4)           # pooled scratch
    vmem_limit = max(16 << 20, min(48 << 20, int(1.5 * resident) + (4 << 20)))

    kernel = functools.partial(_logreg_kernel, set_size=S,
                               unroll_limit=unroll_limit)
    out = pl.pallas_call(
        kernel,
        out_shape=jax.ShapeDtypeStruct((b_pad, c_pad), jnp.float32),
        grid_spec=pltpu.PrefetchScalarGridSpec(
            num_scalar_prefetch=0,
            grid=(b_pad // tb, voc_pad // vc),   # (batch tiles, vocab chunks)
            in_specs=[
                pl.BlockSpec((tb, L), lambda i, k: (i, 0)),
                pl.BlockSpec((tb, L), lambda i, k: (i, 0)),
                pl.BlockSpec((vc, e_pad), lambda i, k: (k, 0)),
                pl.BlockSpec((2 * e_pad, c_pad), lambda i, k: (0, 0)),
                pl.BlockSpec((1, c_pad), lambda i, k: (0, 0)),
            ],
            out_specs=pl.BlockSpec((tb, c_pad), lambda i, k: (i, 0)),
            scratch_shapes=[pltpu.VMEM((2 * tb, e_pad), jnp.float32)],
        ),
        compiler_params=pltpu.CompilerParams(
            dimension_semantics=("parallel", "arbitrary"),
            vmem_limit_bytes=vmem_limit),
    )(d_idx, p_idx, emb, w, b2)
    return out[:B, :C]


def _reference_forward(diag_idx, proc_idx, embedding, weight, bias):
    # Pure-JAX reference mirroring the PyTorch module.
    d = embedding[diag_idx]                           # (B, V, S, E)
    p = embedding[proc_idx]
    d_pool = jnp.sum(jnp.mean(d, axis=2), axis=1)     # (B, E)
    p_pool = jnp.sum(jnp.mean(p, axis=2), axis=1)     # (B, E)
    feat = jnp.concatenate([d_pool, p_pool], axis=1)  # (B, 2E)
    return jnp.dot(feat, weight.T,
                   precision=jax.lax.Precision.HIGHEST) + bias


if __name__ == "__main__":
    # Small synthetic shapes consistent with the module's forward.
    B, V, S = 20, 4, 8        # batch, visits per patient, codes per visit
    VOCAB, E = 320, 32        # frozen embedding table
    C = 4                     # n_class

    key = jax.random.PRNGKey(0)
    k_emb, k_w, k_b, k_d, k_p = jax.random.split(key, 5)

    embedding = jax.random.normal(k_emb, (VOCAB, E), dtype=jnp.float32)
    weight = (jax.random.normal(k_w, (C, 2 * E), dtype=jnp.float32)
              * (1.0 / jnp.sqrt(2.0 * E)))
    bias = jax.random.normal(k_b, (C,), dtype=jnp.float32) * 0.01

    # TODO(synk): the PyTorch forward accepts ragged python lists (variable
    # visit counts / set sizes, possibly with an Embedding padding_idx); here
    # we assume a uniform dense (B, V, S) int index tensor.
    diag_idx = jax.random.randint(k_d, (B, V, S), 0, VOCAB, dtype=jnp.int32)
    proc_idx = jax.random.randint(k_p, (B, V, S), 0, VOCAB, dtype=jnp.int32)

    # vocab_tile=128 -> 3 vocab chunks; batch -> 2 tiles: exercises the
    # init/accumulate/finalize reduction path and the parallel batch axis.
    out = embedded_logreg_forward(diag_idx, proc_idx, embedding, weight, bias,
                                  vocab_tile=128)
    out = jax.block_until_ready(out)

    # Reference using the same bf16 quantization of the frozen table that the
    # kernel uses; everything else stays f32.
    emb_q = embedding.astype(jnp.bfloat16).astype(jnp.float32)
    ref = _reference_forward(diag_idx, proc_idx, emb_q, weight, bias)
    assert out.shape == (B, C), out.shape
    assert jnp.allclose(out, ref, atol=1e-3, rtol=1e-2), (out, ref)

    print("KERNEL_OK")
</pallas_src>

<mosaic_0001>
module attributes {stable_mosaic.version = 11 : i64} {
  func.func @_logreg_kernel(%arg0: i32, %arg1: i32, %arg2: memref<16x32xi32, #tpu.memory_space<vmem>>, %arg3: memref<16x32xi32, #tpu.memory_space<vmem>>, %arg4: memref<128x128xbf16, #tpu.memory_space<vmem>>, %arg5: memref<256x128xf32, #tpu.memory_space<vmem>>, %arg6: memref<1x128xf32, #tpu.memory_space<vmem>>, %arg7: memref<16x128xf32, #tpu.memory_space<vmem>>, %arg8: memref<32x128xf32, #tpu.memory_space<vmem>>) attributes {dimension_semantics = [#tpu.dimension_semantics<parallel>, #tpu.dimension_semantics<arbitrary>], iteration_bounds = array<i64: 2, 3>, scalar_prefetch = 0 : i64, scratch_operands = 1 : i64, tpu.core_type = #tpu.core_type<tc>, window_params = [{transform_indices = @transform_0, window_bounds = array<i64: 16, 32>}, {transform_indices = @transform_1, window_bounds = array<i64: 16, 32>}, {transform_indices = @transform_2, window_bounds = array<i64: 128, 128>}, {pipeline_mode = #tpu.pipeline_mode<synchronous>, transform_indices = @transform_3, window_bounds = array<i64: 256, 128>}, {pipeline_mode = #tpu.pipeline_mode<synchronous>, transform_indices = @transform_4, window_bounds = array<i64: 1, 128>}, {transform_indices = @transform_5, window_bounds = array<i64: 16, 128>}]} {
    %c0_i32 = arith.constant 0 : i32
    %0 = arith.cmpi eq, %arg1, %c0_i32 : i32
    %1 = arith.extui %0 : i1 to i32
    %c0_i32_0 = arith.constant 0 : i32
    %2 = arith.cmpi ne, %1, %c0_i32_0 : i32
    scf.if %2 {
      %cst_12 = arith.constant 0.000000e+00 : f32
      %467 = vector.broadcast %cst_12 : f32 to vector<32x128xf32>
      %c0_13 = arith.constant 0 : index
      %c0_14 = arith.constant 0 : index
      %468 = vector.load %arg8[%c0_13, %c0_14] : memref<32x128xf32, #tpu.memory_space<vmem>>, vector<32x128xf32>
      tpu.vector_store %arg8[%c0_13, %c0_14], %467 {strides = array<i32>} : memref<32x128xf32, #tpu.memory_space<vmem>>, vector<32x128xf32>,
    } else {
    }
    %c0 = arith.constant 0 : index
    %c0_1 = arith.constant 0 : index
    %3 = vector.load %arg2[%c0, %c0_1] : memref<16x32xi32, #tpu.memory_space<vmem>>, vector<16x32xi32>
    %c0_2 = arith.constant 0 : index
    %c0_3 = arith.constant 0 : index
    %4 = vector.load %arg3[%c0_2, %c0_3] : memref<16x32xi32, #tpu.memory_space<vmem>>, vector<16x32xi32>
    %c128_i32 = arith.constant 128 : i32
    %5 = arith.muli %arg1, %c128_i32 : i32
    %6 = tpu.iota {dimensions = array<i32: 1>} : vector<16x128xi32>
    %7 = vector.broadcast %5 : i32 to vector<16x128xi32>
    %8 = arith.addi %6, %7 : vector<16x128xi32>
    %cst = arith.constant 0.000000e+00 : bf16
    %9 = vector.broadcast %cst : bf16 to vector<16x128xbf16>
    %10 = vector.extract_strided_slice %3 {offsets = [0, 0], sizes = [16, 1], strides = [1, 1]} : vector<16x32xi32> to vector<16x1xi32>
    %11 = vector.broadcast %10 : vector<16x1xi32> to vector<16x128xi32>
    %12 = arith.cmpi eq, %11, %8 : vector<16x128xi32>
    %13 = arith.extui %12 : vector<16x128xi1> to vector<16x128xi32>
    %14 = arith.sitofp %13 : vector<16x128xi32> to vector<16x128xf32>
    %15 = arith.truncf %14 : vector<16x128xf32> to vector<16x128xbf16>
    %16 = arith.addf %9, %15 : vector<16x128xbf16>
    %17 = vector.extract_strided_slice %4 {offsets = [0, 0], sizes = [16, 1], strides = [1, 1]} : vector<16x32xi32> to vector<16x1xi32>
    %18 = vector.broadcast %17 : vector<16x1xi32> to vector<16x128xi32>
    %19 = arith.cmpi eq, %18, %8 : vector<16x128xi32>
    %20 = arith.extui %19 : vector<16x128xi1> to vector<16x128xi32>
    %21 = arith.sitofp %20 : vector<16x128xi32> to vector<16x128xf32>
    %22 = arith.truncf %21 : vector<16x128xf32> to vector<16x128xbf16>
    %23 = arith.addf %9, %22 : vector<16x128xbf16>
    %24 = vector.extract_strided_slice %3 {offsets = [0, 1], sizes = [16, 1], strides = [1, 1]} : vector<16x32xi32> to vector<16x1xi32>
    %25 = vector.broadcast %24 : vector<16x1xi32> to vector<16x128xi32>
    %26 = arith.cmpi eq, %25, %8 : vector<16x128xi32>
    %27 = arith.extui %26 : vector<16x128xi1> to vector<16x128xi32>
    %28 = arith.sitofp %27 : vector<16x128xi32> to vector<16x128xf32>
    %29 = arith.truncf %28 : vector<16x128xf32> to vector<16x128xbf16>
    %30 = arith.addf %16, %29 : vector<16x128xbf16>
    %31 = vector.extract_strided_slice %4 {offsets = [0, 1], sizes = [16, 1], strides = [1, 1]} : vector<16x32xi32> to vector<16x1xi32>
    %32 = vector.broadcast %31 : vector<16x1xi32> to vector<16x128xi32>
    %33 = arith.cmpi eq, %32, %8 : vector<16x128xi32>
    %34 = arith.extui %33 : vector<16x128xi1> to vector<16x128xi32>
    %35 = arith.sitofp %34 : vector<16x128xi32> to vector<16x128xf32>
    %36 = arith.truncf %35 : vector<16x128xf32> to vector<16x128xbf16>
    %37 = arith.addf %23, %36 : vector<16x128xbf16>
    %38 = vector.extract_strided_slice %3 {offsets = [0, 2], sizes = [16, 1], strides = [1, 1]} : vector<16x32xi32> to vector<16x1xi32>
    %39 = vector.broadcast %38 : vector<16x1xi32> to vector<16x128xi32>
    %40 = arith.cmpi eq, %39, %8 : vector<16x128xi32>
    %41 = arith.extui %40 : vector<16x128xi1> to vector<16x128xi32>
    %42 = arith.sitofp %41 : vector<16x128xi32> to vector<16x128xf32>
    %43 = arith.truncf %42 : vector<16x128xf32> to vector<16x128xbf16>
    %44 = arith.addf %30, %43 : vector<16x128xbf16>
    %45 = vector.extract_strided_slice %4 {offsets = [0, 2], sizes = [16, 1], strides = [1, 1]} : vector<16x32xi32> to vector<16x1xi32>
    %46 = vector.broadcast %45 : vector<16x1xi32> to vector<16x128xi32>
    %47 = arith.cmpi eq, %46, %8 : vector<16x128xi32>
    %48 = arith.extui %47 : vector<16x128xi1> to vector<16x128xi32>
    %49 = arith.sitofp %48 : vector<16x128xi32> to vector<16x128xf32>
    %50 = arith.truncf %49 : vector<16x128xf32> to vector<16x128xbf16>
    %51 = arith.addf %37, %50 : vector<16x128xbf16>
    %52 = vector.extract_strided_slice %3 {offsets = [0, 3], sizes = [16, 1], strides = [1, 1]} : vector<16x32xi32> to vector<16x1xi32>
    %53 = vector.broadcast %52 : vector<16x1xi32> to vector<16x128xi32>
    %54 = arith.cmpi eq, %53, %8 : vector<16x128xi32>
    %55 = arith.extui %54 : vector<16x128xi1> to vector<16x128xi32>
    %56 = arith.sitofp %55 : vector<16x128xi32> to vector<16x128xf32>
    %57 = arith.truncf %56 : vector<16x128xf32> to vector<16x128xbf16>
    %58 = arith.addf %44, %57 : vector<16x128xbf16>
    %59 = vector.extract_strided_slice %4 {offsets = [0, 3], sizes = [16, 1], strides = [1, 1]} : vector<16x32xi32> to vector<16x1xi32>
    %60 = vector.broadcast %59 : vector<16x1xi32> to vector<16x128xi32>
    %61 = arith.cmpi eq, %60, %8 : vector<16x128xi32>
    %62 = arith.extui %61 : vector<16x128xi1> to vector<16x128xi32>
    %63 = arith.sitofp %62 : vector<16x128xi32> to vector<16x128xf32>
    %64 = arith.truncf %63 : vector<16x128xf32> to vector<16x128xbf16>
    %65 = arith.addf %51, %64 : vector<16x128xbf16>
    %66 = vector.extract_strided_slice %3 {offsets = [0, 4], sizes = [16, 1], strides = [1, 1]} : vector<16x32xi32> to vector<16x1xi32>
    %67 = vector.broadcast %66 : vector<16x1xi32> to vector<16x128xi32>
    %68 = arith.cmpi eq, %67, %8 : vector<16x128xi32>
    %69 = arith.extui %68 : vector<16x128xi1> to vector<16x128xi32>
    %70 = arith.sitofp %69 : vector<16x128xi32> to vector<16x128xf32>
    %71 = arith.truncf %70 : vector<16x128xf32> to vector<16x128xbf16>
    %72 = arith.addf %58, %71 : vector<16x128xbf16>
    %73 = vector.extract_strided_slice %4 {offsets = [0, 4], sizes = [16, 1], strides = [1, 1]} : vector<16x32xi32> to vector<16x1xi32>
    %74 = vector.broadcast %73 : vector<16x1xi32> to vector<16x128xi32>
    %75 = arith.cmpi eq, %74, %8 : vector<16x128xi32>
    %76 = arith.extui %75 : vector<16x128xi1> to vector<16x128xi32>
    %77 = arith.sitofp %76 : vector<16x128xi32> to vector<16x128xf32>
    %78 = arith.truncf %77 : vector<16x128xf32> to vector<16x128xbf16>
    %79 = arith.addf %65, %78 : vector<16x128xbf16>
    %80 = vector.extract_strided_slice %3 {offsets = [0, 5], sizes = [16, 1], strides = [1, 1]} : vector<16x32xi32> to vector<16x1xi32>
    %81 = vector.broadcast %80 : vector<16x1xi32> to vector<16x128xi32>
    %82 = arith.cmpi eq, %81, %8 : vector<16x128xi32>
    %83 = arith.extui %82 : vector<16x128xi1> to vector<16x128xi32>
    %84 = arith.sitofp %83 : vector<16x128xi32> to vector<16x128xf32>
    %85 = arith.truncf %84 : vector<16x128xf32> to vector<16x128xbf16>
    %86 = arith.addf %72, %85 : vector<16x128xbf16>
    %87 = vector.extract_strided_slice %4 {offsets = [0, 5], sizes = [16, 1], strides = [1, 1]} : vector<16x32xi32> to vector<16x1xi32>
    %88 = vector.broadcast %87 : vector<16x1xi32> to vector<16x128xi32>
    %89 = arith.cmpi eq, %88, %8 : vector<16x128xi32>
    %90 = arith.extui %89 : vector<16x128xi1> to vector<16x128xi32>
    %91 = arith.sitofp %90 : vector<16x128xi32> to vector<16x128xf32>
    %92 = arith.truncf %91 : vector<16x128xf32> to vector<16x128xbf16>
    %93 = arith.addf %79, %92 : vector<16x128xbf16>
    %94 = vector.extract_strided_slice %3 {offsets = [0, 6], sizes = [16, 1], strides = [1, 1]} : vector<16x32xi32> to vector<16x1xi32>
    %95 = vector.broadcast %94 : vector<16x1xi32> to vector<16x128xi32>
    %96 = arith.cmpi eq, %95, %8 : vector<16x128xi32>
    %97 = arith.extui %96 : vector<16x128xi1> to vector<16x128xi32>
    %98 = arith.sitofp %97 : vector<16x128xi32> to vector<16x128xf32>
    %99 = arith.truncf %98 : vector<16x128xf32> to vector<16x128xbf16>
    %100 = arith.addf %86, %99 : vector<16x128xbf16>
    %101 = vector.extract_strided_slice %4 {offsets = [0, 6], sizes = [16, 1], strides = [1, 1]} : vector<16x32xi32> to vector<16x1xi32>
    %102 = vector.broadcast %101 : vector<16x1xi32> to vector<16x128xi32>
    %103 = arith.cmpi eq, %102, %8 : vector<16x128xi32>
    %104 = arith.extui %103 : vector<16x128xi1> to vector<16x128xi32>
    %105 = arith.sitofp %104 : vector<16x128xi32> to vector<16x128xf32>
    %106 = arith.truncf %105 : vector<16x128xf32> to vector<16x128xbf16>
    %107 = arith.addf %93, %106 : vector<16x128xbf16>
    %108 = vector.extract_strided_slice %3 {offsets = [0, 7], sizes = [16, 1], strides = [1, 1]} : vector<16x32xi32> to vector<16x1xi32>
    %109 = vector.broadcast %108 : vector<16x1xi32> to vector<16x128xi32>
    %110 = arith.cmpi eq, %109, %8 : vector<16x128xi32>
    %111 = arith.extui %110 : vector<16x128xi1> to vector<16x128xi32>
    %112 = arith.sitofp %111 : vector<16x128xi32> to vector<16x128xf32>
    %113 = arith.truncf %112 : vector<16x128xf32> to vector<16x128xbf16>
    %114 = arith.addf %100, %113 : vector<16x128xbf16>
    %115 = vector.extract_strided_slice %4 {offsets = [0, 7], sizes = [16, 1], strides = [1, 1]} : vector<16x32xi32> to vector<16x1xi32>
    %116 = vector.broadcast %115 : vector<16x1xi32> to vector<16x128xi32>
    %117 = arith.cmpi eq, %116, %8 : vector<16x128xi32>
    %118 = arith.extui %117 : vector<16x128xi1> to vector<16x128xi32>
    %119 = arith.sitofp %118 : vector<16x128xi32> to vector<16x128xf32>
    %120 = arith.truncf %119 : vector<16x128xf32> to vector<16x128xbf16>
    %121 = arith.addf %107, %120 : vector<16x128xbf16>
    %122 = vector.extract_strided_slice %3 {offsets = [0, 8], sizes = [16, 1], strides = [1, 1]} : vector<16x32xi32> to vector<16x1xi32>
    %123 = vector.broadcast %122 : vector<16x1xi32> to vector<16x128xi32>
    %124 = arith.cmpi eq, %123, %8 : vector<16x128xi32>
    %125 = arith.extui %124 : vector<16x128xi1> to vector<16x128xi32>
    %126 = arith.sitofp %125 : vector<16x128xi32> to vector<16x128xf32>
    %127 = arith.truncf %126 : vector<16x128xf32> to vector<16x128xbf16>
    %128 = arith.addf %114, %127 : vector<16x128xbf16>
    %129 = vector.extract_strided_slice %4 {offsets = [0, 8], sizes = [16, 1], strides = [1, 1]} : vector<16x32xi32> to vector<16x1xi32>
    %130 = vector.broadcast %129 : vector<16x1xi32> to vector<16x128xi32>
    %131 = arith.cmpi eq, %130, %8 : vector<16x128xi32>
    %132 = arith.extui %131 : vector<16x128xi1> to vector<16x128xi32>
    %133 = arith.sitofp %132 : vector<16x128xi32> to vector<16x128xf32>
    %134 = arith.truncf %133 : vector<16x128xf32> to vector<16x128xbf16>
    %135 = arith.addf %121, %134 : vector<16x128xbf16>
    %136 = vector.extract_strided_slice %3 {offsets = [0, 9], sizes = [16, 1], strides = [1, 1]} : vector<16x32xi32> to vector<16x1xi32>
    %137 = vector.broadcast %136 : vector<16x1xi32> to vector<16x128xi32>
    %138 = arith.cmpi eq, %137, %8 : vector<16x128xi32>
    %139 = arith.extui %138 : vector<16x128xi1> to vector<16x128xi32>
    %140 = arith.sitofp %139 : vector<16x128xi32> to vector<16x128xf32>
    %141 = arith.truncf %140 : vector<16x128xf32> to vector<16x128xbf16>
    %142 = arith.addf %128, %141 : vector<16x128xbf16>
    %143 = vector.extract_strided_slice %4 {offsets = [0, 9], sizes = [16, 1], strides = [1, 1]} : vector<16x32xi32> to vector<16x1xi32>
    %144 = vector.broadcast %143 : vector<16x1xi32> to vector<16x128xi32>
    %145 = arith.cmpi eq, %144, %8 : vector<16x128xi32>
    %146 = arith.extui %145 : vector<16x128xi1> to vector<16x128xi32>
    %147 = arith.sitofp %146 : vector<16x128xi32> to vector<16x128xf32>
    %148 = arith.truncf %147 : vector<16x128xf32> to vector<16x128xbf16>
    %149 = arith.addf %135, %148 : vector<16x128xbf16>
    %150 = vector.extract_strided_slice %3 {offsets = [0, 10], sizes = [16, 1], strides = [1, 1]} : vector<16x32xi32> to vector<16x1xi32>
    %151 = vector.broadcast %150 : vector<16x1xi32> to vector<16x128xi32>
    %152 = arith.cmpi eq, %151, %8 : vector<16x128xi32>
    %153 = arith.extui %152 : vector<16x128xi1> to vector<16x128xi32>
    %154 = arith.sitofp %153 : vector<16x128xi32> to vector<16x128xf32>
    %155 = arith.truncf %154 : vector<16x128xf32> to vector<16x128xbf16>
    %156 = arith.addf %142, %155 : vector<16x128xbf16>
    %157 = vector.extract_strided_slice %4 {offsets = [0, 10], sizes = [16, 1], strides = [1, 1]} : vector<16x32xi32> to vector<16x1xi32>
    %158 = vector.broadcast %157 : vector<16x1xi32> to vector<16x128xi32>
    %159 = arith.cmpi eq, %158, %8 : vector<16x128xi32>
    %160 = arith.extui %159 : vector<16x128xi1> to vector<16x128xi32>
    %161 = arith.sitofp %160 : vector<16x128xi32> to vector<16x128xf32>
    %162 = arith.truncf %161 : vector<16x128xf32> to vector<16x128xbf16>
    %163 = arith.addf %149, %162 : vector<16x128xbf16>
    %164 = vector.extract_strided_slice %3 {offsets = [0, 11], sizes = [16, 1], strides = [1, 1]} : vector<16x32xi32> to vector<16x1xi32>
    %165 = vector.broadcast %164 : vector<16x1xi32> to vector<16x128xi32>
    %166 = arith.cmpi eq, %165, %8 : vector<16x128xi32>
    %167 = arith.extui %166 : vector<16x128xi1> to vector<16x128xi32>
    %168 = arith.sitofp %167 : vector<16x128xi32> to vector<16x128xf32>
    %169 = arith.truncf %168 : vector<16x128xf32> to vector<16x128xbf16>
    %170 = arith.addf %156, %169 : vector<16x128xbf16>
    %171 = vector.extract_strided_slice %4 {offsets = [0, 11], sizes = [16, 1], strides = [1, 1]} : vector<16x32xi32> to vector<16x1xi32>
    %172 = vector.broadcast %171 : vector<16x1xi32> to vector<16x128xi32>
    %173 = arith.cmpi eq, %172, %8 : vector<16x128xi32>
    %174 = arith.extui %173 : vector<16x128xi1> to vector<16x128xi32>
    %175 = arith.sitofp %174 : vector<16x128xi32> to vector<16x128xf32>
    %176 = arith.truncf %175 : vector<16x128xf32> to vector<16x128xbf16>
    %177 = arith.addf %163, %176 : vector<16x128xbf16>
    %178 = vector.extract_strided_slice %3 {offsets = [0, 12], sizes = [16, 1], strides = [1, 1]} : vector<16x32xi32> to vector<16x1xi32>
    %179 = vector.broadcast %178 : vector<16x1xi32> to vector<16x128xi32>
    %180 = arith.cmpi eq, %179, %8 : vector<16x128xi32>
    %181 = arith.extui %180 : vector<16x128xi1> to vector<16x128xi32>
    %182 = arith.sitofp %181 : vector<16x128xi32> to vector<16x128xf32>
    %183 = arith.truncf %182 : vector<16x128xf32> to vector<16x128xbf16>
    %184 = arith.addf %170, %183 : vector<16x128xbf16>
    %185 = vector.extract_strided_slice %4 {offsets = [0, 12], sizes = [16, 1], strides = [1, 1]} : vector<16x32xi32> to vector<16x1xi32>
    %186 = vector.broadcast %185 : vector<16x1xi32> to vector<16x128xi32>
    %187 = arith.cmpi eq, %186, %8 : vector<16x128xi32>
    %188 = arith.extui %187 : vector<16x128xi1> to vector<16x128xi32>
    %189 = arith.sitofp %188 : vector<16x128xi32> to vector<16x128xf32>
    %190 = arith.truncf %189 : vector<16x128xf32> to vector<16x128xbf16>
    %191 = arith.addf %177, %190 : vector<16x128xbf16>
    %192 = vector.extract_strided_slice %3 {offsets = [0, 13], sizes = [16, 1], strides = [1, 1]} : vector<16x32xi32> to vector<16x1xi32>
    %193 = vector.broadcast %192 : vector<16x1xi32> to vector<16x128xi32>
    %194 = arith.cmpi eq, %193, %8 : vector<16x128xi32>
    %195 = arith.extui %194 : vector<16x128xi1> to vector<16x128xi32>
    %196 = arith.sitofp %195 : vector<16x128xi32> to vector<16x128xf32>
    %197 = arith.truncf %196 : vector<16x128xf32> to vector<16x128xbf16>
    %198 = arith.addf %184, %197 : vector<16x128xbf16>
    %199 = vector.extract_strided_slice %4 {offsets = [0, 13], sizes = [16, 1], strides = [1, 1]} : vector<16x32xi32> to vector<16x1xi32>
    %200 = vector.broadcast %199 : vector<16x1xi32> to vector<16x128xi32>
    %201 = arith.cmpi eq, %200, %8 : vector<16x128xi32>
    %202 = arith.extui %201 : vector<16x128xi1> to vector<16x128xi32>
    %203 = arith.sitofp %202 : vector<16x128xi32> to vector<16x128xf32>
    %204 = arith.truncf %203 : vector<16x128xf32> to vector<16x128xbf16>
    %205 = arith.addf %191, %204 : vector<16x128xbf16>
    %206 = vector.extract_strided_slice %3 {offsets = [0, 14], sizes = [16, 1], strides = [1, 1]} : vector<16x32xi32> to vector<16x1xi32>
    %207 = vector.broadcast %206 : vector<16x1xi32> to vector<16x128xi32>
    %208 = arith.cmpi eq, %207, %8 : vector<16x128xi32>
    %209 = arith.extui %208 : vector<16x128xi1> to vector<16x128xi32>
    %210 = arith.sitofp %209 : vector<16x128xi32> to vector<16x128xf32>
    %211 = arith.truncf %210 : vector<16x128xf32> to vector<16x128xbf16>
    %212 = arith.addf %198, %211 : vector<16x128xbf16>
    %213 = vector.extract_strided_slice %4 {offsets = [0, 14], sizes = [16, 1], strides = [1, 1]} : vector<16x32xi32> to vector<16x1xi32>
    %214 = vector.broadcast %213 : vector<16x1xi32> to vector<16x128xi32>
    %215 = arith.cmpi eq, %214, %8 : vector<16x128xi32>
    %216 = arith.extui %215 : vector<16x128xi1> to vector<16x128xi32>
    %217 = arith.sitofp %216 : vector<16x128xi32> to vector<16x128xf32>
    %218 = arith.truncf %217 : vector<16x128xf32> to vector<16x128xbf16>
    %219 = arith.addf %205, %218 : vector<16x128xbf16>
    %220 = vector.extract_strided_slice %3 {offsets = [0, 15], sizes = [16, 1], strides = [1, 1]} : vector<16x32xi32> to vector<16x1xi32>
    %221 = vector.broadcast %220 : vector<16x1xi32> to vector<16x128xi32>
    %222 = arith.cmpi eq, %221, %8 : vector<16x128xi32>
    %223 = arith.extui %222 : vector<16x128xi1> to vector<16x128xi32>
    %224 = arith.sitofp %223 : vector<16x128xi32> to vector<16x128xf32>
    %225 = arith.truncf %224 : vector<16x128xf32> to vector<16x128xbf16>
    %226 = arith.addf %212, %225 : vector<16x128xbf16>
    %227 = vector.extract_strided_slice %4 {offsets = [0, 15], sizes = [16, 1], strides = [1, 1]} : vector<16x32xi32> to vector<16x1xi32>
    %228 = vector.broadcast %227 : vector<16x1xi32> to vector<16x128xi32>
    %229 = arith.cmpi eq, %228, %8 : vector<16x128xi32>
    %230 = arith.extui %229 : vector<16x128xi1> to vector<16x128xi32>
    %231 = arith.sitofp %230 : vector<16x128xi32> to vector<16x128xf32>
    %232 = arith.truncf %231 : vector<16x128xf32> to vector<16x128xbf16>
    %233 = arith.addf %219, %232 : vector<16x128xbf16>
    %234 = vector.extract_strided_slice %3 {offsets = [0, 16], sizes = [16, 1], strides = [1, 1]} : vector<16x32xi32> to vector<16x1xi32>
    %235 = vector.broadcast %234 : vector<16x1xi32> to vector<16x128xi32>
    %236 = arith.cmpi eq, %235, %8 : vector<16x128xi32>
    %237 = arith.extui %236 : vector<16x128xi1> to vector<16x128xi32>
    %238 = arith.sitofp %237 : vector<16x128xi32> to vector<16x128xf32>
    %239 = arith.truncf %238 : vector<16x128xf32> to vector<16x128xbf16>
    %240 = arith.addf %226, %239 : vector<16x128xbf16>
    %241 = vector.extract_strided_slice %4 {offsets = [0, 16], sizes = [16, 1], strides = [1, 1]} : vector<16x32xi32> to vector<16x1xi32>
    %242 = vector.broadcast %241 : vector<16x1xi32> to vector<16x128xi32>
    %243 = arith.cmpi eq, %242, %8 : vector<16x128xi32>
    %244 = arith.extui %243 : vector<16x128xi1> to vector<16x128xi32>
    %245 = arith.sitofp %244 : vector<16x128xi32> to vector<16x128xf32>
    %246 = arith.truncf %245 : vector<16x128xf32> to vector<16x128xbf16>
    %247 = arith.addf %233, %246 : vector<16x128xbf16>
    %248 = vector.extract_strided_slice %3 {offsets = [0, 17], sizes = [16, 1], strides = [1, 1]} : vector<16x32xi32> to vector<16x1xi32>
    %249 = vector.broadcast %248 : vector<16x1xi32> to vector<16x128xi32>
    %250 = arith.cmpi eq, %249, %8 : vector<16x128xi32>
    %251 = arith.extui %250 : vector<16x128xi1> to vector<16x128xi32>
    %252 = arith.sitofp %251 : vector<16x128xi32> to vector<16x128xf32>
    %253 = arith.truncf %252 : vector<16x128xf32> to vector<16x128xbf16>
    %254 = arith.addf %240, %253 : vector<16x128xbf16>
    %255 = vector.extract_strided_slice %4 {offsets = [0, 17], sizes = [16, 1], strides = [1, 1]} : vector<16x32xi32> to vector<16x1xi32>
    %256 = vector.broadcast %255 : vector<16x1xi32> to vector<16x128xi32>
    %257 = arith.cmpi eq, %256, %8 : vector<16x128xi32>
    %258 = arith.extui %257 : vector<16x128xi1> to vector<16x128xi32>
    %259 = arith.sitofp %258 : vector<16x128xi32> to vector<16x128xf32>
    %260 = arith.truncf %259 : vector<16x128xf32> to vector<16x128xbf16>
    %261 = arith.addf %247, %260 : vector<16x128xbf16>
    %262 = vector.extract_strided_slice %3 {offsets = [0, 18], sizes = [16, 1], strides = [1, 1]} : vector<16x32xi32> to vector<16x1xi32>
    %263 = vector.broadcast %262 : vector<16x1xi32> to vector<16x128xi32>
    %264 = arith.cmpi eq, %263, %8 : vector<16x128xi32>
    %265 = arith.extui %264 : vector<16x128xi1> to vector<16x128xi32>
    %266 = arith.sitofp %265 : vector<16x128xi32> to vector<16x128xf32>
    %267 = arith.truncf %266 : vector<16x128xf32> to vector<16x128xbf16>
    %268 = arith.addf %254, %267 : vector<16x128xbf16>
    %269 = vector.extract_strided_slice %4 {offsets = [0, 18], sizes = [16, 1], strides = [1, 1]} : vector<16x32xi32> to vector<16x1xi32>
    %270 = vector.broadcast %269 : vector<16x1xi32> to vector<16x128xi32>
    %271 = arith.cmpi eq, %270, %8 : vector<16x128xi32>
    %272 = arith.extui %271 : vector<16x128xi1> to vector<16x128xi32>
    %273 = arith.sitofp %272 : vector<16x128xi32> to vector<16x128xf32>
    %274 = arith.truncf %273 : vector<16x128xf32> to vector<16x128xbf16>
    %275 = arith.addf %261, %274 : vector<16x128xbf16>
    %276 = vector.extract_strided_slice %3 {offsets = [0, 19], sizes = [16, 1], strides = [1, 1]} : vector<16x32xi32> to vector<16x1xi32>
    %277 = vector.broadcast %276 : vector<16x1xi32> to vector<16x128xi32>
    %278 = arith.cmpi eq, %277, %8 : vector<16x128xi32>
    %279 = arith.extui %278 : vector<16x128xi1> to vector<16x128xi32>
    %280 = arith.sitofp %279 : vector<16x128xi32> to vector<16x128xf32>
    %281 = arith.truncf %280 : vector<16x128xf32> to vector<16x128xbf16>
    %282 = arith.addf %268, %281 : vector<16x128xbf16>
    %283 = vector.extract_strided_slice %4 {offsets = [0, 19], sizes = [16, 1], strides = [1, 1]} : vector<16x32xi32> to vector<16x1xi32>
    %284 = vector.broadcast %283 : vector<16x1xi32> to vector<16x128xi32>
    %285 = arith.cmpi eq, %284, %8 : vector<16x128xi32>
    %286 = arith.extui %285 : vector<16x128xi1> to vector<16x128xi32>
    %287 = arith.sitofp %286 : vector<16x128xi32> to vector<16x128xf32>
    %288 = arith.truncf %287 : vector<16x128xf32> to vector<16x128xbf16>
    %289 = arith.addf %275, %288 : vector<16x128xbf16>
    %290 = vector.extract_strided_slice %3 {offsets = [0, 20], sizes = [16, 1], strides = [1, 1]} : vector<16x32xi32> to vector<16x1xi32>
    %291 = vector.broadcast %290 : vector<16x1xi32> to vector<16x128xi32>
    %292 = arith.cmpi eq, %291, %8 : vector<16x128xi32>
    %293 = arith.extui %292 : vector<16x128xi1> to vector<16x128xi32>
    %294 = arith.sitofp %293 : vector<16x128xi32> to vector<16x128xf32>
    %295 = arith.truncf %294 : vector<16x128xf32> to vector<16x128xbf16>
    %296 = arith.addf %282, %295 : vector<16x128xbf16>
    %297 = vector.extract_strided_slice %4 {offsets = [0, 20], sizes = [16, 1], strides = [1, 1]} : vector<16x32xi32> to vector<16x1xi32>
    %298 = vector.broadcast %297 : vector<16x1xi32> to vector<16x128xi32>
    %299 = arith.cmpi eq, %298, %8 : vector<16x128xi32>
    %300 = arith.extui %299 : vector<16x128xi1> to vector<16x128xi32>
    %301 = arith.sitofp %300 : vector<16x128xi32> to vector<16x128xf32>
    %302 = arith.truncf %301 : vector<16x128xf32> to vector<16x128xbf16>
    %303 = arith.addf %289, %302 : vector<16x128xbf16>
    %304 = vector.extract_strided_slice %3 {offsets = [0, 21], sizes = [16, 1], strides = [1, 1]} : vector<16x32xi32> to vector<16x1xi32>
    %305 = vector.broadcast %304 : vector<16x1xi32> to vector<16x128xi32>
    %306 = arith.cmpi eq, %305, %8 : vector<16x128xi32>
    %307 = arith.extui %306 : vector<16x128xi1> to vector<16x128xi32>
    %308 = arith.sitofp %307 : vector<16x128xi32> to vector<16x128xf32>
    %309 = arith.truncf %308 : vector<16x128xf32> to vector<16x128xbf16>
    %310 = arith.addf %296, %309 : vector<16x128xbf16>
    %311 = vector.extract_strided_slice %4 {offsets = [0, 21], sizes = [16, 1], strides = [1, 1]} : vector<16x32xi32> to vector<16x1xi32>
    %312 = vector.broadcast %311 : vector<16x1xi32> to vector<16x128xi32>
    %313 = arith.cmpi eq, %312, %8 : vector<16x128xi32>
    %314 = arith.extui %313 : vector<16x128xi1> to vector<16x128xi32>
    %315 = arith.sitofp %314 : vector<16x128xi32> to vector<16x128xf32>
    %316 = arith.truncf %315 : vector<16x128xf32> to vector<16x128xbf16>
    %317 = arith.addf %303, %316 : vector<16x128xbf16>
    %318 = vector.extract_strided_slice %3 {offsets = [0, 22], sizes = [16, 1], strides = [1, 1]} : vector<16x32xi32> to vector<16x1xi32>
    %319 = vector.broadcast %318 : vector<16x1xi32> to vector<16x128xi32>
    %320 = arith.cmpi eq, %319, %8 : vector<16x128xi32>
    %321 = arith.extui %320 : vector<16x128xi1> to vector<16x128xi32>
    %322 = arith.sitofp %321 : vector<16x128xi32> to vector<16x128xf32>
    %323 = arith.truncf %322 : vector<16x128xf32> to vector<16x128xbf16>
    %324 = arith.addf %310, %323 : vector<16x128xbf16>
    %325 = vector.extract_strided_slice %4 {offsets = [0, 22], sizes = [16, 1], strides = [1, 1]} : vector<16x32xi32> to vector<16x1xi32>
    %326 = vector.broadcast %325 : vector<16x1xi32> to vector<16x128xi32>
    %327 = arith.cmpi eq, %326, %8 : vector<16x128xi32>
    %328 = arith.extui %327 : vector<16x128xi1> to vector<16x128xi32>
    %329 = arith.sitofp %328 : vector<16x128xi32> to vector<16x128xf32>
    %330 = arith.truncf %329 : vector<16x128xf32> to vector<16x128xbf16>
    %331 = arith.addf %317, %330 : vector<16x128xbf16>
    %332 = vector.extract_strided_slice %3 {offsets = [0, 23], sizes = [16, 1], strides = [1, 1]} : vector<16x32xi32> to vector<16x1xi32>
    %333 = vector.broadcast %332 : vector<16x1xi32> to vector<16x128xi32>
    %334 = arith.cmpi eq, %333, %8 : vector<16x128xi32>
    %335 = arith.extui %334 : vector<16x128xi1> to vector<16x128xi32>
    %336 = arith.sitofp %335 : vector<16x128xi32> to vector<16x128xf32>
    %337 = arith.truncf %336 : vector<16x128xf32> to vector<16x128xbf16>
    %338 = arith.addf %324, %337 : vector<16x128xbf16>
    %339 = vector.extract_strided_slice %4 {offsets = [0, 23], sizes = [16, 1], strides = [1, 1]} : vector<16x32xi32> to vector<16x1xi32>
    %340 = vector.broadcast %339 : vector<16x1xi32> to vector<16x128xi32>
    %341 = arith.cmpi eq, %340, %8 : vector<16x128xi32>
    %342 = arith.extui %341 : vector<16x128xi1> to vector<16x128xi32>
    %343 = arith.sitofp %342 : vector<16x128xi32> to vector<16x128xf32>
    %344 = arith.truncf %343 : vector<16x128xf32> to vector<16x128xbf16>
    %345 = arith.addf %331, %344 : vector<16x128xbf16>
    %346 = vector.extract_strided_slice %3 {offsets = [0, 24], sizes = [16, 1], strides = [1, 1]} : vector<16x32xi32> to vector<16x1xi32>
    %347 = vector.broadcast %346 : vector<16x1xi32> to vector<16x128xi32>
    %348 = arith.cmpi eq, %347, %8 : vector<16x128xi32>
    %349 = arith.extui %348 : vector<16x128xi1> to vector<16x128xi32>
    %350 = arith.sitofp %349 : vector<16x128xi32> to vector<16x128xf32>
    %351 = arith.truncf %350 : vector<16x128xf32> to vector<16x128xbf16>
    %352 = arith.addf %338, %351 : vector<16x128xbf16>
    %353 = vector.extract_strided_slice %4 {offsets = [0, 24], sizes = [16, 1], strides = [1, 1]} : vector<16x32xi32> to vector<16x1xi32>
    %354 = vector.broadcast %353 : vector<16x1xi32> to vector<16x128xi32>
    %355 = arith.cmpi eq, %354, %8 : vector<16x128xi32>
    %356 = arith.extui %355 : vector<16x128xi1> to vector<16x128xi32>
    %357 = arith.sitofp %356 : vector<16x128xi32> to vector<16x128xf32>
    %358 = arith.truncf %357 : vector<16x128xf32> to vector<16x128xbf16>
    %359 = arith.addf %345, %358 : vector<16x128xbf16>
    %360 = vector.extract_strided_slice %3 {offsets = [0, 25], sizes = [16, 1], strides = [1, 1]} : vector<16x32xi32> to vector<16x1xi32>
    %361 = vector.broadcast %360 : vector<16x1xi32> to vector<16x128xi32>
    %362 = arith.cmpi eq, %361, %8 : vector<16x128xi32>
    %363 = arith.extui %362 : vector<16x128xi1> to vector<16x128xi32>
    %364 = arith.sitofp %363 : vector<16x128xi32> to vector<16x128xf32>
    %365 = arith.truncf %364 : vector<16x128xf32> to vector<16x128xbf16>
    %366 = arith.addf %352, %365 : vector<16x128xbf16>
    %367 = vector.extract_strided_slice %4 {offsets = [0, 25], sizes = [16, 1], strides = [1, 1]} : vector<16x32xi32> to vector<16x1xi32>
    %368 = vector.broadcast %367 : vector<16x1xi32> to vector<16x128xi32>
    %369 = arith.cmpi eq, %368, %8 : vector<16x128xi32>
    %370 = arith.extui %369 : vector<16x128xi1> to vector<16x128xi32>
    %371 = arith.sitofp %370 : vector<16x128xi32> to vector<16x128xf32>
    %372 = arith.truncf %371 : vector<16x128xf32> to vector<16x128xbf16>
    %373 = arith.addf %359, %372 : vector<16x128xbf16>
    %374 = vector.extract_strided_slice %3 {offsets = [0, 26], sizes = [16, 1], strides = [1, 1]} : vector<16x32xi32> to vector<16x1xi32>
    %375 = vector.broadcast %374 : vector<16x1xi32> to vector<16x128xi32>
    %376 = arith.cmpi eq, %375, %8 : vector<16x128xi32>
    %377 = arith.extui %376 : vector<16x128xi1> to vector<16x128xi32>
    %378 = arith.sitofp %377 : vector<16x128xi32> to vector<16x128xf32>
    %379 = arith.truncf %378 : vector<16x128xf32> to vector<16x128xbf16>
    %380 = arith.addf %366, %379 : vector<16x128xbf16>
    %381 = vector.extract_strided_slice %4 {offsets = [0, 26], sizes = [16, 1], strides = [1, 1]} : vector<16x32xi32> to vector<16x1xi32>
    %382 = vector.broadcast %381 : vector<16x1xi32> to vector<16x128xi32>
    %383 = arith.cmpi eq, %382, %8 : vector<16x128xi32>
    %384 = arith.extui %383 : vector<16x128xi1> to vector<16x128xi32>
    %385 = arith.sitofp %384 : vector<16x128xi32> to vector<16x128xf32>
    %386 = arith.truncf %385 : vector<16x128xf32> to vector<16x128xbf16>
    %387 = arith.addf %373, %386 : vector<16x128xbf16>
    %388 = vector.extract_strided_slice %3 {offsets = [0, 27], sizes = [16, 1], strides = [1, 1]} : vector<16x32xi32> to vector<16x1xi32>
    %389 = vector.broadcast %388 : vector<16x1xi32> to vector<16x128xi32>
    %390 = arith.cmpi eq, %389, %8 : vector<16x128xi32>
    %391 = arith.extui %390 : vector<16x128xi1> to vector<16x128xi32>
    %392 = arith.sitofp %391 : vector<16x128xi32> to vector<16x128xf32>
    %393 = arith.truncf %392 : vector<16x128xf32> to vector<16x128xbf16>
    %394 = arith.addf %380, %393 : vector<16x128xbf16>
    %395 = vector.extract_strided_slice %4 {offsets = [0, 27], sizes = [16, 1], strides = [1, 1]} : vector<16x32xi32> to vector<16x1xi32>
    %396 = vector.broadcast %395 : vector<16x1xi32> to vector<16x128xi32>
    %397 = arith.cmpi eq, %396, %8 : vector<16x128xi32>
    %398 = arith.extui %397 : vector<16x128xi1> to vector<16x128xi32>
    %399 = arith.sitofp %398 : vector<16x128xi32> to vector<16x128xf32>
    %400 = arith.truncf %399 : vector<16x128xf32> to vector<16x128xbf16>
    %401 = arith.addf %387, %400 : vector<16x128xbf16>
    %402 = vector.extract_strided_slice %3 {offsets = [0, 28], sizes = [16, 1], strides = [1, 1]} : vector<16x32xi32> to vector<16x1xi32>
    %403 = vector.broadcast %402 : vector<16x1xi32> to vector<16x128xi32>
    %404 = arith.cmpi eq, %403, %8 : vector<16x128xi32>
    %405 = arith.extui %404 : vector<16x128xi1> to vector<16x128xi32>
    %406 = arith.sitofp %405 : vector<16x128xi32> to vector<16x128xf32>
    %407 = arith.truncf %406 : vector<16x128xf32> to vector<16x128xbf16>
    %408 = arith.addf %394, %407 : vector<16x128xbf16>
    %409 = vector.extract_strided_slice %4 {offsets = [0, 28], sizes = [16, 1], strides = [1, 1]} : vector<16x32xi32> to vector<16x1xi32>
    %410 = vector.broadcast %409 : vector<16x1xi32> to vector<16x128xi32>
    %411 = arith.cmpi eq, %410, %8 : vector<16x128xi32>
    %412 = arith.extui %411 : vector<16x128xi1> to vector<16x128xi32>
    %413 = arith.sitofp %412 : vector<16x128xi32> to vector<16x128xf32>
    %414 = arith.truncf %413 : vector<16x128xf32> to vector<16x128xbf16>
    %415 = arith.addf %401, %414 : vector<16x128xbf16>
    %416 = vector.extract_strided_slice %3 {offsets = [0, 29], sizes = [16, 1], strides = [1, 1]} : vector<16x32xi32> to vector<16x1xi32>
    %417 = vector.broadcast %416 : vector<16x1xi32> to vector<16x128xi32>
    %418 = arith.cmpi eq, %417, %8 : vector<16x128xi32>
    %419 = arith.extui %418 : vector<16x128xi1> to vector<16x128xi32>
    %420 = arith.sitofp %419 : vector<16x128xi32> to vector<16x128xf32>
    %421 = arith.truncf %420 : vector<16x128xf32> to vector<16x128xbf16>
    %422 = arith.addf %408, %421 : vector<16x128xbf16>
    %423 = vector.extract_strided_slice %4 {offsets = [0, 29], sizes = [16, 1], strides = [1, 1]} : vector<16x32xi32> to vector<16x1xi32>
    %424 = vector.broadcast %423 : vector<16x1xi32> to vector<16x128xi32>
    %425 = arith.cmpi eq, %424, %8 : vector<16x128xi32>
    %426 = arith.extui %425 : vector<16x128xi1> to vector<16x128xi32>
    %427 = arith.sitofp %426 : vector<16x128xi32> to vector<16x128xf32>
    %428 = arith.truncf %427 : vector<16x128xf32> to vector<16x128xbf16>
    %429 = arith.addf %415, %428 : vector<16x128xbf16>
    %430 = vector.extract_strided_slice %3 {offsets = [0, 30], sizes = [16, 1], strides = [1, 1]} : vector<16x32xi32> to vector<16x1xi32>
    %431 = vector.broadcast %430 : vector<16x1xi32> to vector<16x128xi32>
    %432 = arith.cmpi eq, %431, %8 : vector<16x128xi32>
    %433 = arith.extui %432 : vector<16x128xi1> to vector<16x128xi32>
    %434 = arith.sitofp %433 : vector<16x128xi32> to vector<16x128xf32>
    %435 = arith.truncf %434 : vector<16x128xf32> to vector<16x128xbf16>
    %436 = arith.addf %422, %435 : vector<16x128xbf16>
    %437 = vector.extract_strided_slice %4 {offsets = [0, 30], sizes = [16, 1], strides = [1, 1]} : vector<16x32xi32> to vector<16x1xi32>
    %438 = vector.broadcast %437 : vector<16x1xi32> to vector<16x128xi32>
    %439 = arith.cmpi eq, %438, %8 : vector<16x128xi32>
    %440 = arith.extui %439 : vector<16x128xi1> to vector<16x128xi32>
    %441 = arith.sitofp %440 : vector<16x128xi32> to vector<16x128xf32>
    %442 = arith.truncf %441 : vector<16x128xf32> to vector<16x128xbf16>
    %443 = arith.addf %429, %442 : vector<16x128xbf16>
    %444 = vector.extract_strided_slice %3 {offsets = [0, 31], sizes = [16, 1], strides = [1, 1]} : vector<16x32xi32> to vector<16x1xi32>
    %445 = vector.broadcast %444 : vector<16x1xi32> to vector<16x128xi32>
    %446 = arith.cmpi eq, %445, %8 : vector<16x128xi32>
    %447 = arith.extui %446 : vector<16x128xi1> to vector<16x128xi32>
    %448 = arith.sitofp %447 : vector<16x128xi32> to vector<16x128xf32>
    %449 = arith.truncf %448 : vector<16x128xf32> to vector<16x128xbf16>
    %450 = arith.addf %436, %449 : vector<16x128xbf16>
    %451 = vector.extract_strided_slice %4 {offsets = [0, 31], sizes = [16, 1], strides = [1, 1]} : vector<16x32xi32> to vector<16x1xi32>
    %452 = vector.broadcast %451 : vector<16x1xi32> to vector<16x128xi32>
    %453 = arith.cmpi eq, %452, %8 : vector<16x128xi32>
    %454 = arith.extui %453 : vector<16x128xi1> to vector<16x128xi32>
    %455 = arith.sitofp %454 : vector<16x128xi32> to vector<16x128xf32>
    %456 = arith.truncf %455 : vector<16x128xf32> to vector<16x128xbf16>
    %457 = arith.addf %443, %456 : vector<16x128xbf16>
    %458 = tpu.concatenate %450, %457 in 0 : vector<16x128xbf16>, vector<16x128xbf16> -> vector<32x128xbf16>
    %c0_4 = arith.constant 0 : index
    %c0_5 = arith.constant 0 : index
    %459 = vector.load %arg8[%c0_4, %c0_5] : memref<32x128xf32, #tpu.memory_space<vmem>>, vector<32x128xf32>
    %c0_6 = arith.constant 0 : index
    %c0_7 = arith.constant 0 : index
    %460 = vector.load %arg4[%c0_6, %c0_7] : memref<128x128xbf16, #tpu.memory_space<vmem>>, vector<128x128xbf16>
    %cst_8 = arith.constant dense<0.000000e+00> : vector<32x128xf32>
    %461 = tpu.matmul %458, %460, %cst_8 {dimension_numbers = #tpu.dot_dimension_numbers<[1], [0], [0], [1], [0, 0, 1, 1], [], []>} : vector<32x128xbf16>, vector<128x128xbf16>, vector<32x128xf32> -> vector<32x128xf32>
    %462 = arith.addf %459, %461 : vector<32x128xf32>
    %c0_9 = arith.constant 0 : index
    %c0_10 = arith.constant 0 : index
    %463 = vector.load %arg8[%c0_9, %c0_10] : memref<32x128xf32, #tpu.memory_space<vmem>>, vector<32x128xf32>
    tpu.vector_store %arg8[%c0_9, %c0_10], %462 {strides = array<i32>} : memref<32x128xf32, #tpu.memory_space<vmem>>, vector<32x128xf32>,
    %c2_i32 = arith.constant 2 : i32
    %464 = arith.cmpi eq, %arg1, %c2_i32 : i32
    %465 = arith.extui %464 : i1 to i32
    %c0_i32_11 = arith.constant 0 : i32
    %466 = arith.cmpi ne, %465, %c0_i32_11 : i32
    scf.if %466 {
      %c0_12 = arith.constant 0 : index
      %c0_13 = arith.constant 0 : index
      %467 = vector.load %arg8[%c0_12, %c0_13] : memref<32x128xf32, #tpu.memory_space<vmem>>, vector<32x128xf32>
      %cst_14 = arith.constant 1.250000e-01 : f32
      %468 = vector.broadcast %cst_14 : f32 to vector<32x128xf32>
      %469 = arith.mulf %467, %468 : vector<32x128xf32>
      %470 = vector.extract_strided_slice %469 {offsets = [0, 0], sizes = [16, 128], strides = [1, 1]} : vector<32x128xf32> to vector<16x128xf32>
      %471 = vector.extract_strided_slice %469 {offsets = [16, 0], sizes = [16, 128], strides = [1, 1]} : vector<32x128xf32> to vector<16x128xf32>
      %472 = tpu.concatenate %470, %471 in 1 : vector<16x128xf32>, vector<16x128xf32> -> vector<16x256xf32>
      %c0_15 = arith.constant 0 : index
      %c0_16 = arith.constant 0 : index
      %473 = vector.load %arg5[%c0_15, %c0_16] : memref<256x128xf32, #tpu.memory_space<vmem>>, vector<256x128xf32>
      %cst_17 = arith.constant dense<0.000000e+00> : vector<16x128xf32>
      %474 = tpu.matmul %472, %473, %cst_17 {dimension_numbers = #tpu.dot_dimension_numbers<[1], [0], [0], [1], [0, 0, 1, 1], [], []>} : vector<16x256xf32>, vector<256x128xf32>, vector<16x128xf32> -> vector<16x128xf32>
      %c0_18 = arith.constant 0 : index
      %c0_19 = arith.constant 0 : index
      %475 = vector.load %arg6[%c0_18, %c0_19] : memref<1x128xf32, #tpu.memory_space<vmem>>, vector<1x128xf32>
      %476 = vector.broadcast %475 : vector<1x128xf32> to vector<16x128xf32>
      %477 = arith.addf %474, %476 : vector<16x128xf32>
      %c0_20 = arith.constant 0 : index
      %c0_21 = arith.constant 0 : index
      %478 = vector.load %arg7[%c0_20, %c0_21] : memref<16x128xf32, #tpu.memory_space<vmem>>, vector<16x128xf32>
      tpu.vector_store %arg7[%c0_20, %c0_21], %477 {strides = array<i32>} : memref<16x128xf32, #tpu.memory_space<vmem>>, vector<16x128xf32>,
    } else {
    }
    return
  }
  func.func @transform_0(%arg0: i32, %arg1: i32) -> (i32, i32) {
    %c0_i32 = arith.constant 0 : i32
    %c0_i32_0 = arith.constant 0 : i32
    return %arg0, %c0_i32 : i32, i32
  }
  func.func @transform_1(%arg0: i32, %arg1: i32) -> (i32, i32) {
    %c0_i32 = arith.constant 0 : i32
    %c0_i32_0 = arith.constant 0 : i32
    return %arg0, %c0_i32 : i32, i32
  }
  func.func @transform_2(%arg0: i32, %arg1: i32) -> (i32, i32) {
    %c0_i32 = arith.constant 0 : i32
    %c0_i32_0 = arith.constant 0 : i32
    return %arg1, %c0_i32 : i32, i32
  }
  func.func @transform_3(%arg0: i32, %arg1: i32) -> (i32, i32) {
    %c0_i32 = arith.constant 0 : i32
    %c0_i32_0 = arith.constant 0 : i32
    %c0_i32_1 = arith.constant 0 : i32
    return %c0_i32, %c0_i32_0 : i32, i32
  }
  func.func @transform_4(%arg0: i32, %arg1: i32) -> (i32, i32) {
    %c0_i32 = arith.constant 0 : i32
    %c0_i32_0 = arith.constant 0 : i32
    %c0_i32_1 = arith.constant 0 : i32
    return %c0_i32, %c0_i32_0 : i32, i32
  }
  func.func @transform_5(%arg0: i32, %arg1: i32) -> (i32, i32) {
    %c0_i32 = arith.constant 0 : i32
    %c0_i32_0 = arith.constant 0 : i32
    return %arg0, %c0_i32 : i32, i32
  }
}

</mosaic_0001>

<llo_original>
// kernel: tpu_custom_call.1
$region0: #{tpu_custom_call.1}
  #allocation0 [shape = 'u32[]', space=smem, size = 0x4, offset = 0x4, fixed_abs, tag = 'smem constant byte address 0x4 - core index']
  #allocation1 [shape = 'u32[144,128]{1,0:T(1,128)}', space=vmem, size = 0x12000, scoped, tag = 'internal scratch']
  #allocation2 [shape = 'f32[32,128]{1,0:T(8,128)}', space=vmem, size = 0x4000, scoped, tag = 'scratch operand']
  %s0 = inlined_call_operand.hbm [shape: s32[32,32], index: 0, kind: input, shape index: {}]
  %s1 = inlined_call_operand.hbm [shape: s32[32,32], index: 1, kind: input, shape index: {}]
  %s2 = inlined_call_operand.hbm [shape: bf16[384,128], index: 2, kind: input, shape index: {}]
  %s3 = inlined_call_operand.hbm [shape: f32[256,128], index: 3, kind: input, shape index: {}]
  %s4 = inlined_call_operand.vmem [shape: f32[1,128], index: 4, kind: input, shape index: {}]
  %s5 = inlined_call_operand.hbm [shape: f32[32,128], index: 5, kind: output, shape index: {}]
  %s6 = sld [smem:[#allocation0]]
  $region77: #{tpu_custom_call.1} parent=0
    _
  %s8 = ssub.s32 1, %s6
  %s9 = scalar_select 0, %s8, %s6
  $region1: #{tpu_custom_call.1} parent=0
    #allocation3 [shape = 'u8[16384]{0}', space=vmem, size = 0x4000, scoped, tag = 'input window, operand 0']
    #allocation4 [shape = 's32[2]{0}', space=sflag, size = 0x8, scoped, tag = 'scoped memory for tpu_custom_call.1']
    #allocation5 [shape = 's32[2]{0}', space=sflag, size = 0x8, scoped, tag = 'scoped memory for tpu_custom_call.1']
    #allocation6 [shape = 'u8[16384]{0}', space=vmem, size = 0x4000, scoped, tag = 'input window, operand 1']
    #allocation7 [shape = 's32[2]{0}', space=sflag, size = 0x8, scoped, tag = 'scoped memory for tpu_custom_call.1']
    #allocation8 [shape = 'u8[65536]{0}', space=vmem, size = 0x10000, scoped, tag = 'input window, operand 2']
    #allocation9 [shape = 'u8[131072]{0}', space=vmem, size = 0x20000, scoped, tag = 'input window, operand 3, single buffered']
    #allocation10 [shape = 's32[1]{0}', space=sflag, size = 0x4, scoped, tag = 'scoped memory for tpu_custom_call.1']
    #allocation11 [shape = 'u8[16384]{0}', space=vmem, size = 0x4000, scoped, tag = 'output window, operand 0']
    %10 = vsyncpa [#allocation4], 0
    %s11 = scalar_lea.sflag [#allocation4], 1
    %12 = vsyncpa %s11, 0
    %13 = vsyncpa [#allocation7], 0
    %s14 = scalar_lea.sflag [#allocation7], 1
    %15 = vsyncpa %s14, 0
    %16 = vsyncpa [#allocation10], 0
    %17 = vsyncpa [#allocation5], 0
    %s18 = scalar_lea.sflag [#allocation5], 1
    %19 = vsyncpa %s18, 0
    loop: start=0, step=1, limit=8
    $region2: #{tpu_custom_call.1} parent=1 // loop_pre_header
      _
    $region3: #{tpu_custom_call.1} parent=1 // loop_header
      %s21 = sphi 0, %s25
      %p22 = scmp.ge.s32.totalorder %s21, 8
      %s28 = sphi 0, %s40
      %s29 = sphi 0, %s36
      %s30 = sphi 0, %s28
      %s31 = sphi 0, %s29
      %s32 = sphi 0, %s30
      %s33 = sphi 0, %s31
      %s43 = sphi 0, %s45
      %s46 = sphi 0, %s43
      %s47 = sphi 0, %s46
      %s63 = sphi 0, %s47
      %s69 = sphi 0, %s71
      %s72 = sphi 0, %s69
      %s73 = sphi 0, %s72
      %s89 = sphi 0, %s73
      %s95 = sphi 0, %s97
      %s98 = sphi 0, %s95
      %s99 = sphi 0, %s98
      %s115 = sphi 0, %s99
      %s119 = sphi 0, %s119
      %s121 = sphi 0, %s119
      %s122 = sphi 0, %s121
      %s136 = sphi 0, %s122
      %s140 = sphi 0, %s140
      %s142 = sphi 0, %s140
      %s143 = sphi 0, %s142
      %s157 = sphi 0, %s143
      %s163 = sphi 0, %s165
      %s166 = sphi 0, %s163
      %s167 = sphi 0, %s166
      %s183 = sphi 0, %s167
    $region4: #{tpu_custom_call.1} parent=1 // loop_header_branch
      %24 = sbr.rel (%p22) target = $region8
    $region5: #{tpu_custom_call.1} parent=1 // loop_body
      %s26 = ssub.s32 %s21, 1
      %s27 = ssub.s32 %s21, 2
      %s34 = sadd.s32 1, %s29
      %p35 = scmp.ge.s32.totalorder %s34, 3
      %s36 = scalar_select %p35, 0, %s34
      %s37 = sadd.s32 1, %s28
      %s38 = scalar_select %p35, %s37, %s28
      %p39 = scmp.ge.s32.totalorder %s38, 2
      %s40 = scalar_select %p39, 0, %s38
      %s41 = ssub.s32 %s28, %s40
      %p42 = scmp.eq.s32.totalorder %s41, 0
      %s44 = sadd.s32 %s43, 1
      %s45 = scalar_select %p42, %s43, %s44
      %p48 = pneg %p42
      %p49 = scmp.eq.s32.totalorder %s21, 5
      %p50 = por %p48, %p49
      %p51 = scmp.ne.s32.totalorder %s43, %s46
      %p52 = scmp.eq.s32.totalorder %s21, 0
      %p53 = por %p51, %p52
      %p54 = scmp.ne.s32.totalorder %s43, %s46
      %p55 = scmp.eq.s32.totalorder %s26, 5
      %p56 = por %p54, %p55
      %p57 = scmp.ne.s32.totalorder %s46, %s47
      %p58 = scmp.eq.s32.totalorder %s26, 0
      %p59 = por %p57, %p58
      %p60 = scmp.ne.s32.totalorder %s46, %s47
      %p61 = scmp.eq.s32.totalorder %s27, 5
      %p62 = por %p60, %p61
      %p64 = scmp.ne.s32.totalorder %s47, %s63
      %p65 = scmp.eq.s32.totalorder %s27, 0
      %p66 = por %p64, %p65
      %s67 = ssub.s32 %s28, %s40
      %p68 = scmp.eq.s32.totalorder %s67, 0
      %s70 = sadd.s32 %s69, 1
      %s71 = scalar_select %p68, %s69, %s70
      %p74 = pneg %p68
      %p75 = scmp.eq.s32.totalorder %s21, 5
      %p76 = por %p74, %p75
      %p77 = scmp.ne.s32.totalorder %s69, %s72
      %p78 = scmp.eq.s32.totalorder %s21, 0
      %p79 = por %p77, %p78
      %p80 = scmp.ne.s32.totalorder %s69, %s72
      %p81 = scmp.eq.s32.totalorder %s26, 5
      %p82 = por %p80, %p81
      %p83 = scmp.ne.s32.totalorder %s72, %s73
      %p84 = scmp.eq.s32.totalorder %s26, 0
      %p85 = por %p83, %p84
      %p86 = scmp.ne.s32.totalorder %s72, %s73
      %p87 = scmp.eq.s32.totalorder %s27, 5
      %p88 = por %p86, %p87
      %p90 = scmp.ne.s32.totalorder %s73, %s89
      %p91 = scmp.eq.s32.totalorder %s27, 0
      %p92 = por %p90, %p91
      %s93 = ssub.s32 %s29, %s36
      %p94 = scmp.eq.s32.totalorder %s93, 0
      %s96 = sadd.s32 %s95, 1
      %s97 = scalar_select %p94, %s95, %s96
      %p100 = pneg %p94
      %p101 = scmp.eq.s32.totalorder %s21, 5
      %p102 = por %p100, %p101
      %p103 = scmp.ne.s32.totalorder %s95, %s98
      %p104 = scmp.eq.s32.totalorder %s21, 0
      %p105 = por %p103, %p104
      %p106 = scmp.ne.s32.totalorder %s95, %s98
      %p107 = scmp.eq.s32.totalorder %s26, 5
      %p108 = por %p106, %p107
      %p109 = scmp.ne.s32.totalorder %s98, %s99
      %p110 = scmp.eq.s32.totalorder %s26, 0
      %p111 = por %p109, %p110
      %p112 = scmp.ne.s32.totalorder %s98, %s99
      %p113 = scmp.eq.s32.totalorder %s27, 5
      %p114 = por %p112, %p113
      %p116 = scmp.ne.s32.totalorder %s99, %s115
      %p117 = scmp.eq.s32.totalorder %s27, 0
      %p118 = por %p116, %p117
      %s120 = sadd.s32 %s119, 1
      %p123 = scmp.eq.s32.totalorder %s21, 5
      %p124 = scmp.ne.s32.totalorder %s119, %s121
      %p125 = scmp.eq.s32.totalorder %s21, 0
      %p126 = por %p124, %p125
      %p127 = scmp.ne.s32.totalorder %s119, %s121
      %p128 = scmp.eq.s32.totalorder %s26, 5
      %p129 = por %p127, %p128
      %p130 = scmp.ne.s32.totalorder %s121, %s122
      %p131 = scmp.eq.s32.totalorder %s26, 0
      %p132 = por %p130, %p131
      %p133 = scmp.ne.s32.totalorder %s121, %s122
      %p134 = scmp.eq.s32.totalorder %s27, 5
      %p135 = por %p133, %p134
      %p137 = scmp.ne.s32.totalorder %s122, %s136
      %p138 = scmp.eq.s32.totalorder %s27, 0
      %p139 = por %p137, %p138
      %s141 = sadd.s32 %s140, 1
      %p144 = scmp.eq.s32.totalorder %s21, 5
      %p145 = scmp.ne.s32.totalorder %s140, %s142
      %p146 = scmp.eq.s32.totalorder %s21, 0
      %p147 = por %p145, %p146
      %p148 = scmp.ne.s32.totalorder %s140, %s142
      %p149 = scmp.eq.s32.totalorder %s26, 5
      %p150 = por %p148, %p149
      %p151 = scmp.ne.s32.totalorder %s142, %s143
      %p152 = scmp.eq.s32.totalorder %s26, 0
      %p153 = por %p151, %p152
      %p154 = scmp.ne.s32.totalorder %s142, %s143
      %p155 = scmp.eq.s32.totalorder %s27, 5
      %p156 = por %p154, %p155
      %p158 = scmp.ne.s32.totalorder %s143, %s157
      %p159 = scmp.eq.s32.totalorder %s27, 0
      %p160 = por %p158, %p159
      %s161 = ssub.s32 %s28, %s40
      %p162 = scmp.eq.s32.totalorder %s161, 0
      %s164 = sadd.s32 %s163, 1
      %s165 = scalar_select %p162, %s163, %s164
      %p168 = pneg %p162
      %p169 = scmp.eq.s32.totalorder %s21, 5
      %p170 = por %p168, %p169
      %p171 = scmp.ne.s32.totalorder %s163, %s166
      %p172 = scmp.eq.s32.totalorder %s21, 0
      %p173 = por %p171, %p172
      %p174 = scmp.ne.s32.totalorder %s163, %s166
      %p175 = scmp.eq.s32.totalorder %s26, 5
      %p176 = por %p174, %p175
      %p177 = scmp.ne.s32.totalorder %s166, %s167
      %p178 = scmp.eq.s32.totalorder %s26, 0
      %p179 = por %p177, %p178
      %p180 = scmp.ne.s32.totalorder %s166, %s167
      %p181 = scmp.eq.s32.totalorder %s27, 5
      %p182 = por %p180, %p181
      %p184 = scmp.ne.s32.totalorder %s167, %s183
      %p185 = scmp.eq.s32.totalorder %s27, 0
      %p186 = por %p184, %p185
      %p187 = scmp.le.s32.totalorder 1, %s21
      %p188 = scmp.lt.s32.totalorder %s21, 7
      %p189 = pnand %p187, %p188
      %p190 = pneg %p189
      // Predicated region
      $region9: #{tpu_custom_call.1} parent=5 // pred_check
        _
      $region10: #{tpu_custom_call.1} parent=5 // pred_check_branch
        %192 = sbr.rel (%p189) target = $region12
      $region11: #{tpu_custom_call.1} parent=5 // pred_region
        %s193 = ssub.s32 %s21, 1
        // Predicated region
        $region13: #{tpu_custom_call.1} parent=11 // pred_check
          %p194 = pneg %p132
        $region14: #{tpu_custom_call.1} parent=11 // pred_check_branch
          %196 = sbr.rel (%p194) target = $region16
        $region15: #{tpu_custom_call.1} parent=11 // pred_region
          %s198 = ssub.s32 4096, 4096
          %199 = vsyncadd [#allocation10], %s198
          %s200 = sshll.u32 [#allocation9], 4
          %s201 = int_to_ptr.vmem [resolvable:$true] %s200
          %206 = dma.hbm_to_vmem [thread:$0]  %s3, 4096, %s201, [#allocation10], 128, 128, 8
        $region16: #{tpu_custom_call.1} parent=11 // pred_fallthru
          _
        // Predicated region
        $region17: #{tpu_custom_call.1} parent=11 // pred_check
          %p207 = pneg %p153
        $region18: #{tpu_custom_call.1} parent=11 // pred_check_branch
          %209 = sbr.rel (%p207) target = $region20
        $region19: #{tpu_custom_call.1} parent=11 // pred_region
          _
        $region20: #{tpu_custom_call.1} parent=11 // pred_fallthru
          _
      $region12: #{tpu_custom_call.1} parent=5 // pred_fallthru
        _
      %p210 = scmp.lt.s32.totalorder %s21, 6
      // Predicated region
      $region21: #{tpu_custom_call.1} parent=5 // pred_check
        %p211 = pneg %p210
      $region22: #{tpu_custom_call.1} parent=5 // pred_check_branch
        %213 = sbr.rel (%p211) target = $region24
      $region23: #{tpu_custom_call.1} parent=5 // pred_region
        // Predicated region
        $region25: #{tpu_custom_call.1} parent=23 // pred_check
          %p214 = pneg %p53
        $region26: #{tpu_custom_call.1} parent=23 // pred_check_branch
          %216 = sbr.rel (%p214) target = $region28
        $region27: #{tpu_custom_call.1} parent=23 // pred_region
          %s217 = sand.u32 %s43, 1
          %s218 = scalar_lea.sflag [#allocation4], %s217
          %s219 = sand.u32 %s43, 1
          %s220 = smul.addr %s219, 16
          %s221 = scalar_lea.vmem [#allocation3], %s220
          %s222 = smul.u32 2, %s28
          %s224 = ssub.s32 256, 256
          %225 = vsyncadd %s218, %s224
          %s226 = smul.addr %s222, 128
          %s227 = scalar_lea.hbm %s0, %s226
          %s228 = sshll.u32 %s221, 4
          %s229 = int_to_ptr.vmem [resolvable:$true] %s228
          %234 = dma.hbm_to_vmem [thread:$0]  %s227, 256, %s229, %s218, 128, 128, 8
        $region28: #{tpu_custom_call.1} parent=23 // pred_fallthru
          _
        // Predicated region
        $region29: #{tpu_custom_call.1} parent=23 // pred_check
          %p235 = pneg %p79
        $region30: #{tpu_custom_call.1} parent=23 // pred_check_branch
          %237 = sbr.rel (%p235) target = $region32
        $region31: #{tpu_custom_call.1} parent=23 // pred_region
          %s238 = sand.u32 %s21, 1
          %s239 = scalar_lea.sflag [#allocation7], %s238
          %s240 = sand.u32 %s69, 1
          %s241 = smul.addr %s240, 16
          %s242 = scalar_lea.vmem [#allocation6], %s241
          %s243 = smul.u32 2, %s28
          %s245 = ssub.s32 256, 256
          %246 = vsyncadd %s239, %s245
          %s247 = smul.addr %s243, 128
          %s248 = scalar_lea.hbm %s1, %s247
          %s249 = sshll.u32 %s242, 4
          %s250 = int_to_ptr.vmem [resolvable:$true] %s249
          %255 = dma.hbm_to_vmem [thread:$0]  %s248, 256, %s250, %s239, 128, 128, 8
        $region32: #{tpu_custom_call.1} parent=23 // pred_fallthru
          _
        // Predicated region
        $region33: #{tpu_custom_call.1} parent=23 // pred_check
          %p256 = pneg %p105
        $region34: #{tpu_custom_call.1} parent=23 // pred_check_branch
          %258 = sbr.rel (%p256) target = $region36
        $region35: #{tpu_custom_call.1} parent=23 // pred_region
          %s259 = sand.u32 %s21, 1
          %s260 = scalar_lea.sflag [#allocation7], %s259
          %s261 = sand.u32 %s95, 1
          %s262 = smul.addr %s261, 64
          %s263 = scalar_lea.vmem [#allocation8], %s262
          %s264 = smul.u32 16, %s29
          %s266 = ssub.s32 1024, 1024
          %267 = vsyncadd %s260, %s266
          %s268 = smul.addr %s264, 64
          %s269 = scalar_lea.hbm %s2, %s268
          %s270 = sshll.u32 %s263, 4
          %s271 = int_to_ptr.vmem [resolvable:$true] %s270
          %276 = dma.hbm_to_vmem [thread:$0]  %s269, 1024, %s271, %s260, 64, 64, 4
        $region36: #{tpu_custom_call.1} parent=23 // pred_fallthru
          _
      $region24: #{tpu_custom_call.1} parent=5 // pred_fallthru
        _
      %p277 = scmp.le.s32.totalorder 1, %s21
      %p278 = scmp.lt.s32.totalorder %s21, 7
      %p279 = pnand %p277, %p278
      %p280 = pneg %p279
      // Predicated region
      $region37: #{tpu_custom_call.1} parent=5 // pred_check
        _
      $region38: #{tpu_custom_call.1} parent=5 // pred_check_branch
        %282 = sbr.rel (%p279) target = $region40
      $region39: #{tpu_custom_call.1} parent=5 // pred_region
        %s283 = ssub.s32 %s21, 1
        %s284 = sand.u32 %s46, 1
        %s285 = scalar_lea.sflag [#allocation4], %s284
        %s286 = sand.u32 %s46, 1
        %s287 = smul.addr %s286, 16
        %s288 = scalar_lea.vmem [#allocation3], %s287
        // Predicated region
        $region41: #{tpu_custom_call.1} parent=39 // pred_check
          %p289 = pneg %p59
        $region42: #{tpu_custom_call.1} parent=39 // pred_check_branch
          %291 = sbr.rel (%p289) target = $region44
        $region43: #{tpu_custom_call.1} parent=39 // pred_region
          %292 = dma.done %s285, 256
        $region44: #{tpu_custom_call.1} parent=39 // pred_fallthru
          _
        %s293 = sand.u32 %s26, 1
        %s294 = scalar_lea.sflag [#allocation7], %s293
        %s295 = sand.u32 %s72, 1
        %s296 = smul.addr %s295, 16
        %s297 = scalar_lea.vmem [#allocation6], %s296
        // Predicated region
        $region45: #{tpu_custom_call.1} parent=39 // pred_check
          %p298 = pneg %p85
        $region46: #{tpu_custom_call.1} parent=39 // pred_check_branch
          %300 = sbr.rel (%p298) target = $region48
        $region47: #{tpu_custom_call.1} parent=39 // pred_region
          %301 = dma.done %s294, 256
        $region48: #{tpu_custom_call.1} parent=39 // pred_fallthru
          _
        %s302 = sand.u32 %s26, 1
        %s303 = scalar_lea.sflag [#allocation7], %s302
        %s304 = sand.u32 %s98, 1
        %s305 = smul.addr %s304, 64
        %s306 = scalar_lea.vmem [#allocation8], %s305
        // Predicated region
        $region49: #{tpu_custom_call.1} parent=39 // pred_check
          %p307 = pneg %p111
        $region50: #{tpu_custom_call.1} parent=39 // pred_check_branch
          %309 = sbr.rel (%p307) target = $region52
        $region51: #{tpu_custom_call.1} parent=39 // pred_region
          %310 = dma.done %s303, 1024
        $region52: #{tpu_custom_call.1} parent=39 // pred_fallthru
          _
        // Predicated region
        $region53: #{tpu_custom_call.1} parent=39 // pred_check
          %p311 = pneg %p132
        $region54: #{tpu_custom_call.1} parent=39 // pred_check_branch
          %313 = sbr.rel (%p311) target = $region56
        $region55: #{tpu_custom_call.1} parent=39 // pred_region
          %314 = dma.done [#allocation10], 4096
        $region56: #{tpu_custom_call.1} parent=39 // pred_fallthru
          _
        %s315 = sand.u32 %s46, 1
        %s316 = scalar_lea.sflag [#allocation4], %s315
        %s317 = sand.u32 %s46, 1
        %s318 = smul.addr %s317, 16
        %s319 = scalar_lea.vmem [#allocation3], %s318
        %p320 = pneg %p59
        %p321 = pneg %p56
        %s322 = sand.u32 %s26, 1
        %s323 = scalar_lea.sflag [#allocation7], %s322
        %s324 = sand.u32 %s72, 1
        %s325 = smul.addr %s324, 16
        %s326 = scalar_lea.vmem [#allocation6], %s325
        %p327 = pneg %p85
        %p328 = pneg %p82
        %s329 = sand.u32 %s26, 1
        %s330 = scalar_lea.sflag [#allocation7], %s329
        %s331 = sand.u32 %s98, 1
        %s332 = smul.addr %s331, 64
        %s333 = scalar_lea.vmem [#allocation8], %s332
        %p334 = pneg %p111
        %p335 = pneg %p108
        %p336 = pneg %p132
        %p337 = pneg %p129
        %p338 = pneg %p153
        %p339 = pneg %p150
        %p340 = pneg %p179
        %p341 = pneg %p176
        %s342 = sand.u32 %s166, 1
        %s343 = scalar_lea.sflag [#allocation5], %s342
        %s344 = sand.u32 %s166, 1
        %s345 = smul.addr %s344, 16
        %s346 = scalar_lea.vmem [#allocation11], %s345
        %s347 = smul.u32 2, %s30
        %s348 = smul.u32 2, %s30
        %s349 = smul.u32 16, %s31
        %s350 = smul.u32 2, %s30
        %p352 = scmp.eq.s32.totalorder %s31, 0
        // Predicated region
        $region57: #{tpu_custom_call.1} parent=39 // pred_check
          %p353 = pneg %p352
        $region58: #{tpu_custom_call.1} parent=39 // pred_check_branch
          %355 = sbr.rel (%p353) target = $region60
        $region59: #{tpu_custom_call.1} parent=39 // pred_region
          %356 = vst [vmem:[#allocation2] sm:$0xff] 0.0
          %357 = vst [vmem:[#allocation2 + $0x8] sm:$0xff] 0.0
          %358 = vst [vmem:[#allocation2 + $0x10] sm:$0xff] 0.0
          %359 = vst [vmem:[#allocation2 + $0x18] sm:$0xff] 0.0
        $region60: #{tpu_custom_call.1} parent=39 // pred_fallthru
          _
        %v360 = vld [vmem:[%s288] sm:$0xff]
        %v361 = vld [vmem:[%s288 + $0x8] sm:$0xff]
        %v362 = vld [vmem:[%s297] sm:$0xff]
        %v363 = vld [vmem:[%s297 + $0x8] sm:$0xff]
        %s364 = smul.u32 %s31, 128
        %v365 = vlaneseq
        %v366 = vand.u32 %v365, 127
        %v367 = vstv %s364
        %v368 = vadd.s32 %v366, %v367
        %369 = vset.pattern.permute.xlu0 0
        %370 = vperm.xlu0 %369, %v360
        %v371 = vpop.permute.xlu0 %370
        %372 = vset.pattern.permute.xlu0 0
        %373 = vperm.xlu0 %372, %v361
        %v374 = vpop.permute.xlu0 %373
        %vm375 = vcmp.eq.s32.totalorder %v371, %v368
        %vm376 = vcmp.eq.s32.totalorder %v374, %v368
        %v377 = vsel %vm375, 1, 0
        %v378 = vsel %vm376, 1, 0
        %v379 = vcvt.s32.f32 %v377
        %v380 = vcvt.s32.f32 %v378
        %v381 = vpack.c.bf16 %v380, %v379
        %v382 = vadd.bf16 %v381, 0
        %383 = vset.pattern.permute.xlu0 0
        %384 = vperm.xlu0 %383, %v362
        %v385 = vpop.permute.xlu0 %384
        %386 = vset.pattern.permute.xlu0 0
        %387 = vperm.xlu0 %386, %v363
        %v388 = vpop.permute.xlu0 %387
        %vm389 = vcmp.eq.s32.totalorder %v385, %v368
        %vm390 = vcmp.eq.s32.totalorder %v388, %v368
        %v391 = vsel %vm389, 1, 0
        %v392 = vsel %vm390, 1, 0
        %v393 = vcvt.s32.f32 %v391
        %v394 = vcvt.s32.f32 %v392
        %v395 = vpack.c.bf16 %v394, %v393
        %v396 = vadd.bf16 %v395, 0
        %397 = vset.pattern.permute.xlu0 1
        %398 = vperm.xlu0 %397, %v360
        %v399 = vpop.permute.xlu0 %398
        %400 = vset.pattern.permute.xlu0 1
        %401 = vperm.xlu0 %400, %v361
        %v402 = vpop.permute.xlu0 %401
        %vm403 = vcmp.eq.s32.totalorder %v399, %v368
        %vm404 = vcmp.eq.s32.totalorder %v402, %v368
        %v405 = vsel %vm403, 1, 0
        %v406 = vsel %vm404, 1, 0
        %v407 = vcvt.s32.f32 %v405
        %v408 = vcvt.s32.f32 %v406
        %v409 = vpack.c.bf16 %v408, %v407
        %v410 = vadd.bf16 %v382, %v409
        %411 = vset.pattern.permute.xlu0 1
        %412 = vperm.xlu0 %411, %v362
        %v413 = vpop.permute.xlu0 %412
        %414 = vset.pattern.permute.xlu0 1
        %415 = vperm.xlu0 %414, %v363
        %v416 = vpop.permute.xlu0 %415
        %vm417 = vcmp.eq.s32.totalorder %v413, %v368
        %vm418 = vcmp.eq.s32.totalorder %v416, %v368
        %v419 = vsel %vm417, 1, 0
        %v420 = vsel %vm418, 1, 0
        %v421 = vcvt.s32.f32 %v419
        %v422 = vcvt.s32.f32 %v420
        %v423 = vpack.c.bf16 %v422, %v421
        %v424 = vadd.bf16 %v396, %v423
        %425 = vset.pattern.permute.xlu0 2
        %426 = vperm.xlu0 %425, %v360
        %v427 = vpop.permute.xlu0 %426
        %428 = vset.pattern.permute.xlu0 2
        %429 = vperm.xlu0 %428, %v361
        %v430 = vpop.permute.xlu0 %429
        %vm431 = vcmp.eq.s32.totalorder %v427, %v368
        %vm432 = vcmp.eq.s32.totalorder %v430, %v368
        %v433 = vsel %vm431, 1, 0
        %v434 = vsel %vm432, 1, 0
        %v435 = vcvt.s32.f32 %v433
        %v436 = vcvt.s32.f32 %v434
        %v437 = vpack.c.bf16 %v436, %v435
        %v438 = vadd.bf16 %v410, %v437
        %439 = vset.pattern.permute.xlu0 2
        %440 = vperm.xlu0 %439, %v362
        %v441 = vpop.permute.xlu0 %440
        %442 = vset.pattern.permute.xlu0 2
        %443 = vperm.xlu0 %442, %v363
        %v444 = vpop.permute.xlu0 %443
        %vm445 = vcmp.eq.s32.totalorder %v441, %v368
        %vm446 = vcmp.eq.s32.totalorder %v444, %v368
        %v447 = vsel %vm445, 1, 0
        %v448 = vsel %vm446, 1, 0
        %v449 = vcvt.s32.f32 %v447
        %v450 = vcvt.s32.f32 %v448
        %v451 = vpack.c.bf16 %v450, %v449
        %v452 = vadd.bf16 %v424, %v451
        %453 = vset.pattern.permute.xlu0 3
        %454 = vperm.xlu0 %453, %v360
        %v455 = vpop.permute.xlu0 %454
        %456 = vset.pattern.permute.xlu0 3
        %457 = vperm.xlu0 %456, %v361
        %v458 = vpop.permute.xlu0 %457
        %vm459 = vcmp.eq.s32.totalorder %v455, %v368
        %vm460 = vcmp.eq.s32.totalorder %v458, %v368
        %v461 = vsel %vm459, 1, 0
        %v462 = vsel %vm460, 1, 0
        %v463 = vcvt.s32.f32 %v461
        %v464 = vcvt.s32.f32 %v462
        %v465 = vpack.c.bf16 %v464, %v463
        %v466 = vadd.bf16 %v438, %v465
        %467 = vset.pattern.permute.xlu0 3
        %468 = vperm.xlu0 %467, %v362
        %v469 = vpop.permute.xlu0 %468
        %470 = vset.pattern.permute.xlu0 3
        %471 = vperm.xlu0 %470, %v363
        %v472 = vpop.permute.xlu0 %471
        %vm473 = vcmp.eq.s32.totalorder %v469, %v368
        %vm474 = vcmp.eq.s32.totalorder %v472, %v368
        %v475 = vsel %vm473, 1, 0
        %v476 = vsel %vm474, 1, 0
        %v477 = vcvt.s32.f32 %v475
        %v478 = vcvt.s32.f32 %v476
        %v479 = vpack.c.bf16 %v478, %v477
        %v480 = vadd.bf16 %v452, %v479
        %481 = vset.pattern.permute.xlu0 4
        %482 = vperm.xlu0 %481, %v360
        %v483 = vpop.permute.xlu0 %482
        %484 = vset.pattern.permute.xlu0 4
        %485 = vperm.xlu0 %484, %v361
        %v486 = vpop.permute.xlu0 %485
        %vm487 = vcmp.eq.s32.totalorder %v483, %v368
        %vm488 = vcmp.eq.s32.totalorder %v486, %v368
        %v489 = vsel %vm487, 1, 0
        %v490 = vsel %vm488, 1, 0
        %v491 = vcvt.s32.f32 %v489
        %v492 = vcvt.s32.f32 %v490
        %v493 = vpack.c.bf16 %v492, %v491
        %v494 = vadd.bf16 %v466, %v493
        %495 = vset.pattern.permute.xlu0 4
        %496 = vperm.xlu0 %495, %v362
        %v497 = vpop.permute.xlu0 %496
        %498 = vset.pattern.permute.xlu0 4
        %499 = vperm.xlu0 %498, %v363
        %v500 = vpop.permute.xlu0 %499
        %vm501 = vcmp.eq.s32.totalorder %v497, %v368
        %vm502 = vcmp.eq.s32.totalorder %v500, %v368
        %v503 = vsel %vm501, 1, 0
        %v504 = vsel %vm502, 1, 0
        %v505 = vcvt.s32.f32 %v503
        %v506 = vcvt.s32.f32 %v504
        %v507 = vpack.c.bf16 %v506, %v505
        %v508 = vadd.bf16 %v480, %v507
        %509 = vset.pattern.permute.xlu0 5
        %510 = vperm.xlu0 %509, %v360
        %v511 = vpop.permute.xlu0 %510
        %512 = vset.pattern.permute.xlu0 5
        %513 = vperm.xlu0 %512, %v361
        %v514 = vpop.permute.xlu0 %513
        %vm515 = vcmp.eq.s32.totalorder %v511, %v368
        %vm516 = vcmp.eq.s32.totalorder %v514, %v368
        %v517 = vsel %vm515, 1, 0
        %v518 = vsel %vm516, 1, 0
        %v519 = vcvt.s32.f32 %v517
        %v520 = vcvt.s32.f32 %v518
        %v521 = vpack.c.bf16 %v520, %v519
        %v522 = vadd.bf16 %v494, %v521
        %523 = vset.pattern.permute.xlu0 5
        %524 = vperm.xlu0 %523, %v362
        %v525 = vpop.permute.xlu0 %524
        %526 = vset.pattern.permute.xlu0 5
        %527 = vperm.xlu0 %526, %v363
        %v528 = vpop.permute.xlu0 %527
        %vm529 = vcmp.eq.s32.totalorder %v525, %v368
        %vm530 = vcmp.eq.s32.totalorder %v528, %v368
        %v531 = vsel %vm529, 1, 0
        %v532 = vsel %vm530, 1, 0
        %v533 = vcvt.s32.f32 %v531
        %v534 = vcvt.s32.f32 %v532
        %v535 = vpack.c.bf16 %v534, %v533
        %v536 = vadd.bf16 %v508, %v535
        %537 = vset.pattern.permute.xlu0 6
        %538 = vperm.xlu0 %537, %v360
        %v539 = vpop.permute.xlu0 %538
        %540 = vset.pattern.permute.xlu0 6
        %541 = vperm.xlu0 %540, %v361
        %v542 = vpop.permute.xlu0 %541
        %vm543 = vcmp.eq.s32.totalorder %v539, %v368
        %vm544 = vcmp.eq.s32.totalorder %v542, %v368
        %v545 = vsel %vm543, 1, 0
        %v546 = vsel %vm544, 1, 0
        %v547 = vcvt.s32.f32 %v545
        %v548 = vcvt.s32.f32 %v546
        %v549 = vpack.c.bf16 %v548, %v547
        %v550 = vadd.bf16 %v522, %v549
        %551 = vset.pattern.permute.xlu0 6
        %552 = vperm.xlu0 %551, %v362
        %v553 = vpop.permute.xlu0 %552
        %554 = vset.pattern.permute.xlu0 6
        %555 = vperm.xlu0 %554, %v363
        %v556 = vpop.permute.xlu0 %555
        %vm557 = vcmp.eq.s32.totalorder %v553, %v368
        %vm558 = vcmp.eq.s32.totalorder %v556, %v368
        %v559 = vsel %vm557, 1, 0
        %v560 = vsel %vm558, 1, 0
        %v561 = vcvt.s32.f32 %v559
        %v562 = vcvt.s32.f32 %v560
        %v563 = vpack.c.bf16 %v562, %v561
        %v564 = vadd.bf16 %v536, %v563
        %565 = vset.pattern.permute.xlu0 7
        %566 = vperm.xlu0 %565, %v360
        %v567 = vpop.permute.xlu0 %566
        %568 = vset.pattern.permute.xlu0 7
        %569 = vperm.xlu0 %568, %v361
        %v570 = vpop.permute.xlu0 %569
        %vm571 = vcmp.eq.s32.totalorder %v567, %v368
        %vm572 = vcmp.eq.s32.totalorder %v570, %v368
        %v573 = vsel %vm571, 1, 0
        %v574 = vsel %vm572, 1, 0
        %v575 = vcvt.s32.f32 %v573
        %v576 = vcvt.s32.f32 %v574
        %v577 = vpack.c.bf16 %v576, %v575
        %v578 = vadd.bf16 %v550, %v577
        %579 = vset.pattern.permute.xlu0 7
        %580 = vperm.xlu0 %579, %v362
        %v581 = vpop.permute.xlu0 %580
        %582 = vset.pattern.permute.xlu0 7
        %583 = vperm.xlu0 %582, %v363
        %v584 = vpop.permute.xlu0 %583
        %vm585 = vcmp.eq.s32.totalorder %v581, %v368
        %vm586 = vcmp.eq.s32.totalorder %v584, %v368
        %v587 = vsel %vm585, 1, 0
        %v588 = vsel %vm586, 1, 0
        %v589 = vcvt.s32.f32 %v587
        %v590 = vcvt.s32.f32 %v588
        %v591 = vpack.c.bf16 %v590, %v589
        %v592 = vadd.bf16 %v564, %v591
        %593 = vset.pattern.permute.xlu0 8
        %594 = vperm.xlu0 %593, %v360
        %v595 = vpop.permute.xlu0 %594
        %596 = vset.pattern.permute.xlu0 8
        %597 = vperm.xlu0 %596, %v361
        %v598 = vpop.permute.xlu0 %597
        %vm599 = vcmp.eq.s32.totalorder %v595, %v368
        %vm600 = vcmp.eq.s32.totalorder %v598, %v368
        %v601 = vsel %vm599, 1, 0
        %v602 = vsel %vm600, 1, 0
        %v603 = vcvt.s32.f32 %v601
        %v604 = vcvt.s32.f32 %v602
        %v605 = vpack.c.bf16 %v604, %v603
        %v606 = vadd.bf16 %v578, %v605
        %607 = vset.pattern.permute.xlu0 8
        %608 = vperm.xlu0 %607, %v362
        %v609 = vpop.permute.xlu0 %608
        %610 = vset.pattern.permute.xlu0 8
        %611 = vperm.xlu0 %610, %v363
        %v612 = vpop.permute.xlu0 %611
        %vm613 = vcmp.eq.s32.totalorder %v609, %v368
        %vm614 = vcmp.eq.s32.totalorder %v612, %v368
        %v615 = vsel %vm613, 1, 0
        %v616 = vsel %vm614, 1, 0
        %v617 = vcvt.s32.f32 %v615
        %v618 = vcvt.s32.f32 %v616
        %v619 = vpack.c.bf16 %v618, %v617
        %v620 = vadd.bf16 %v592, %v619
        %621 = vset.pattern.permute.xlu0 9
        %622 = vperm.xlu0 %621, %v360
        %v623 = vpop.permute.xlu0 %622
        %624 = vset.pattern.permute.xlu0 9
        %625 = vperm.xlu0 %624, %v361
        %v626 = vpop.permute.xlu0 %625
        %vm627 = vcmp.eq.s32.totalorder %v623, %v368
        %vm628 = vcmp.eq.s32.totalorder %v626, %v368
        %v629 = vsel %vm627, 1, 0
        %v630 = vsel %vm628, 1, 0
        %v631 = vcvt.s32.f32 %v629
        %v632 = vcvt.s32.f32 %v630
        %v633 = vpack.c.bf16 %v632, %v631
        %v634 = vadd.bf16 %v606, %v633
        %635 = vset.pattern.permute.xlu0 9
        %636 = vperm.xlu0 %635, %v362
        %v637 = vpop.permute.xlu0 %636
        %638 = vset.pattern.permute.xlu0 9
        %639 = vperm.xlu0 %638, %v363
        %v640 = vpop.permute.xlu0 %639
        %vm641 = vcmp.eq.s32.totalorder %v637, %v368
        %vm642 = vcmp.eq.s32.totalorder %v640, %v368
        %v643 = vsel %vm641, 1, 0
        %v644 = vsel %vm642, 1, 0
        %v645 = vcvt.s32.f32 %v643
        %v646 = vcvt.s32.f32 %v644
        %v647 = vpack.c.bf16 %v646, %v645
        %v648 = vadd.bf16 %v620, %v647
        %649 = vset.pattern.permute.xlu0 10
        %650 = vperm.xlu0 %649, %v360
        %v651 = vpop.permute.xlu0 %650
        %652 = vset.pattern.permute.xlu0 10
        %653 = vperm.xlu0 %652, %v361
        %v654 = vpop.permute.xlu0 %653
        %vm655 = vcmp.eq.s32.totalorder %v651, %v368
        %vm656 = vcmp.eq.s32.totalorder %v654, %v368
        %v657 = vsel %vm655, 1, 0
        %v658 = vsel %vm656, 1, 0
        %v659 = vcvt.s32.f32 %v657
        %v660 = vcvt.s32.f32 %v658
        %v661 = vpack.c.bf16 %v660, %v659
        %v662 = vadd.bf16 %v634, %v661
        %663 = vset.pattern.permute.xlu0 10
        %664 = vperm.xlu0 %663, %v362
        %v665 = vpop.permute.xlu0 %664
        %666 = vset.pattern.permute.xlu0 10
        %667 = vperm.xlu0 %666, %v363
        %v668 = vpop.permute.xlu0 %667
        %vm669 = vcmp.eq.s32.totalorder %v665, %v368
        %vm670 = vcmp.eq.s32.totalorder %v668, %v368
        %v671 = vsel %vm669, 1, 0
        %v672 = vsel %vm670, 1, 0
        %v673 = vcvt.s32.f32 %v671
        %v674 = vcvt.s32.f32 %v672
        %v675 = vpack.c.bf16 %v674, %v673
        %v676 = vadd.bf16 %v648, %v675
        %677 = vset.pattern.permute.xlu0 11
        %678 = vperm.xlu0 %677, %v360
        %v679 = vpop.permute.xlu0 %678
        %680 = vset.pattern.permute.xlu0 11
        %681 = vperm.xlu0 %680, %v361
        %v682 = vpop.permute.xlu0 %681
        %vm683 = vcmp.eq.s32.totalorder %v679, %v368
        %vm684 = vcmp.eq.s32.totalorder %v682, %v368
        %v685 = vsel %vm683, 1, 0
        %v686 = vsel %vm684, 1, 0
        %v687 = vcvt.s32.f32 %v685
        %v688 = vcvt.s32.f32 %v686
        %v689 = vpack.c.bf16 %v688, %v687
        %v690 = vadd.bf16 %v662, %v689
        %691 = vset.pattern.permute.xlu0 11
        %692 = vperm.xlu0 %691, %v362
        %v693 = vpop.permute.xlu0 %692
        %694 = vset.pattern.permute.xlu0 11
        %695 = vperm.xlu0 %694, %v363
        %v696 = vpop.permute.xlu0 %695
        %vm697 = vcmp.eq.s32.totalorder %v693, %v368
        %vm698 = vcmp.eq.s32.totalorder %v696, %v368
        %v699 = vsel %vm697, 1, 0
        %v700 = vsel %vm698, 1, 0
        %v701 = vcvt.s32.f32 %v699
        %v702 = vcvt.s32.f32 %v700
        %v703 = vpack.c.bf16 %v702, %v701
        %v704 = vadd.bf16 %v676, %v703
        %705 = vset.pattern.permute.xlu0 12
        %706 = vperm.xlu0 %705, %v360
        %v707 = vpop.permute.xlu0 %706
        %708 = vset.pattern.permute.xlu0 12
        %709 = vperm.xlu0 %708, %v361
        %v710 = vpop.permute.xlu0 %709
        %vm711 = vcmp.eq.s32.totalorder %v707, %v368
        %vm712 = vcmp.eq.s32.totalorder %v710, %v368
        %v713 = vsel %vm711, 1, 0
        %v714 = vsel %vm712, 1, 0
        %v715 = vcvt.s32.f32 %v713
        %v716 = vcvt.s32.f32 %v714
        %v717 = vpack.c.bf16 %v716, %v715
        %v718 = vadd.bf16 %v690, %v717
        %719 = vset.pattern.permute.xlu0 12
        %720 = vperm.xlu0 %719, %v362
        %v721 = vpop.permute.xlu0 %720
        %722 = vset.pattern.permute.xlu0 12
        %723 = vperm.xlu0 %722, %v363
        %v724 = vpop.permute.xlu0 %723
        %vm725 = vcmp.eq.s32.totalorder %v721, %v368
        %vm726 = vcmp.eq.s32.totalorder %v724, %v368
        %v727 = vsel %vm725, 1, 0
        %v728 = vsel %vm726, 1, 0
        %v729 = vcvt.s32.f32 %v727
        %v730 = vcvt.s32.f32 %v728
        %v731 = vpack.c.bf16 %v730, %v729
        %v732 = vadd.bf16 %v704, %v731
        %733 = vset.pattern.permute.xlu0 13
        %734 = vperm.xlu0 %733, %v360
        %v735 = vpop.permute.xlu0 %734
        %736 = vset.pattern.permute.xlu0 13
        %737 = vperm.xlu0 %736, %v361
        %v738 = vpop.permute.xlu0 %737
        %vm739 = vcmp.eq.s32.totalorder %v735, %v368
        %vm740 = vcmp.eq.s32.totalorder %v738, %v368
        %v741 = vsel %vm739, 1, 0
        %v742 = vsel %vm740, 1, 0
        %v743 = vcvt.s32.f32 %v741
        %v744 = vcvt.s32.f32 %v742
        %v745 = vpack.c.bf16 %v744, %v743
        %v746 = vadd.bf16 %v718, %v745
        %747 = vset.pattern.permute.xlu0 13
        %748 = vperm.xlu0 %747, %v362
        %v749 = vpop.permute.xlu0 %748
        %750 = vset.pattern.permute.xlu0 13
        %751 = vperm.xlu0 %750, %v363
        %v752 = vpop.permute.xlu0 %751
        %vm753 = vcmp.eq.s32.totalorder %v749, %v368
        %vm754 = vcmp.eq.s32.totalorder %v752, %v368
        %v755 = vsel %vm753, 1, 0
        %v756 = vsel %vm754, 1, 0
        %v757 = vcvt.s32.f32 %v755
        %v758 = vcvt.s32.f32 %v756
        %v759 = vpack.c.bf16 %v758, %v757
        %v760 = vadd.bf16 %v732, %v759
        %761 = vset.pattern.permute.xlu0 14
        %762 = vperm.xlu0 %761, %v360
        %v763 = vpop.permute.xlu0 %762
        %764 = vset.pattern.permute.xlu0 14
        %765 = vperm.xlu0 %764, %v361
        %v766 = vpop.permute.xlu0 %765
        %vm767 = vcmp.eq.s32.totalorder %v763, %v368
        %vm768 = vcmp.eq.s32.totalorder %v766, %v368
        %v769 = vsel %vm767, 1, 0
        %v770 = vsel %vm768, 1, 0
        %v771 = vcvt.s32.f32 %v769
        %v772 = vcvt.s32.f32 %v770
        %v773 = vpack.c.bf16 %v772, %v771
        %v774 = vadd.bf16 %v746, %v773
        %775 = vset.pattern.permute.xlu0 14
        %776 = vperm.xlu0 %775, %v362
        %v777 = vpop.permute.xlu0 %776
        %778 = vset.pattern.permute.xlu0 14
        %779 = vperm.xlu0 %778, %v363
        %v780 = vpop.permute.xlu0 %779
        %vm781 = vcmp.eq.s32.totalorder %v777, %v368
        %vm782 = vcmp.eq.s32.totalorder %v780, %v368
        %v783 = vsel %vm781, 1, 0
        %v784 = vsel %vm782, 1, 0
        %v785 = vcvt.s32.f32 %v783
        %v786 = vcvt.s32.f32 %v784
        %v787 = vpack.c.bf16 %v786, %v785
        %v788 = vadd.bf16 %v760, %v787
        %789 = vset.pattern.permute.xlu0 15
        %790 = vperm.xlu0 %789, %v360
        %v791 = vpop.permute.xlu0 %790
        %792 = vset.pattern.permute.xlu0 15
        %793 = vperm.xlu0 %792, %v361
        %v794 = vpop.permute.xlu0 %793
        %vm795 = vcmp.eq.s32.totalorder %v791, %v368
        %vm796 = vcmp.eq.s32.totalorder %v794, %v368
        %v797 = vsel %vm795, 1, 0
        %v798 = vsel %vm796, 1, 0
        %v799 = vcvt.s32.f32 %v797
        %v800 = vcvt.s32.f32 %v798
        %v801 = vpack.c.bf16 %v800, %v799
        %v802 = vadd.bf16 %v774, %v801
        %803 = vset.pattern.permute.xlu0 15
        %804 = vperm.xlu0 %803, %v362
        %v805 = vpop.permute.xlu0 %804
        %806 = vset.pattern.permute.xlu0 15
        %807 = vperm.xlu0 %806, %v363
        %v808 = vpop.permute.xlu0 %807
        %vm809 = vcmp.eq.s32.totalorder %v805, %v368
        %vm810 = vcmp.eq.s32.totalorder %v808, %v368
        %v811 = vsel %vm809, 1, 0
        %v812 = vsel %vm810, 1, 0
        %v813 = vcvt.s32.f32 %v811
        %v814 = vcvt.s32.f32 %v812
        %v815 = vpack.c.bf16 %v814, %v813
        %v816 = vadd.bf16 %v788, %v815
        %817 = vset.pattern.permute.xlu0 16
        %818 = vperm.xlu0 %817, %v360
        %v819 = vpop.permute.xlu0 %818
        %820 = vset.pattern.permute.xlu0 16
        %821 = vperm.xlu0 %820, %v361
        %v822 = vpop.permute.xlu0 %821
        %vm823 = vcmp.eq.s32.totalorder %v819, %v368
        %vm824 = vcmp.eq.s32.totalorder %v822, %v368
        %v825 = vsel %vm823, 1, 0
        %v826 = vsel %vm824, 1, 0
        %v827 = vcvt.s32.f32 %v825
        %v828 = vcvt.s32.f32 %v826
        %v829 = vpack.c.bf16 %v828, %v827
        %v830 = vadd.bf16 %v802, %v829
        %831 = vset.pattern.permute.xlu0 16
        %832 = vperm.xlu0 %831, %v362
        %v833 = vpop.permute.xlu0 %832
        %834 = vset.pattern.permute.xlu0 16
        %835 = vperm.xlu0 %834, %v363
        %v836 = vpop.permute.xlu0 %835
        %vm837 = vcmp.eq.s32.totalorder %v833, %v368
        %vm838 = vcmp.eq.s32.totalorder %v836, %v368
        %v839 = vsel %vm837, 1, 0
        %v840 = vsel %vm838, 1, 0
        %v841 = vcvt.s32.f32 %v839
        %v842 = vcvt.s32.f32 %v840
        %v843 = vpack.c.bf16 %v842, %v841
        %v844 = vadd.bf16 %v816, %v843
        %845 = vset.pattern.permute.xlu0 17
        %846 = vperm.xlu0 %845, %v360
        %v847 = vpop.permute.xlu0 %846
        %848 = vset.pattern.permute.xlu0 17
        %849 = vperm.xlu0 %848, %v361
        %v850 = vpop.permute.xlu0 %849
        %vm851 = vcmp.eq.s32.totalorder %v847, %v368
        %vm852 = vcmp.eq.s32.totalorder %v850, %v368
        %v853 = vsel %vm851, 1, 0
        %v854 = vsel %vm852, 1, 0
        %v855 = vcvt.s32.f32 %v853
        %v856 = vcvt.s32.f32 %v854
        %v857 = vpack.c.bf16 %v856, %v855
        %v858 = vadd.bf16 %v830, %v857
        %859 = vset.pattern.permute.xlu0 17
        %860 = vperm.xlu0 %859, %v362
        %v861 = vpop.permute.xlu0 %860
        %862 = vset.pattern.permute.xlu0 17
        %863 = vperm.xlu0 %862, %v363
        %v864 = vpop.permute.xlu0 %863
        %vm865 = vcmp.eq.s32.totalorder %v861, %v368
        %vm866 = vcmp.eq.s32.totalorder %v864, %v368
        %v867 = vsel %vm865, 1, 0
        %v868 = vsel %vm866, 1, 0
        %v869 = vcvt.s32.f32 %v867
        %v870 = vcvt.s32.f32 %v868
        %v871 = vpack.c.bf16 %v870, %v869
        %v872 = vadd.bf16 %v844, %v871
        %873 = vset.pattern.permute.xlu0 18
        %874 = vperm.xlu0 %873, %v360
        %v875 = vpop.permute.xlu0 %874
        %876 = vset.pattern.permute.xlu0 18
        %877 = vperm.xlu0 %876, %v361
        %v878 = vpop.permute.xlu0 %877
        %vm879 = vcmp.eq.s32.totalorder %v875, %v368
        %vm880 = vcmp.eq.s32.totalorder %v878, %v368
        %v881 = vsel %vm879, 1, 0
        %v882 = vsel %vm880, 1, 0
        %v883 = vcvt.s32.f32 %v881
        %v884 = vcvt.s32.f32 %v882
        %v885 = vpack.c.bf16 %v884, %v883
        %v886 = vadd.bf16 %v858, %v885
        %887 = vset.pattern.permute.xlu0 18
        %888 = vperm.xlu0 %887, %v362
        %v889 = vpop.permute.xlu0 %888
        %890 = vset.pattern.permute.xlu0 18
        %891 = vperm.xlu0 %890, %v363
        %v892 = vpop.permute.xlu0 %891
        %vm893 = vcmp.eq.s32.totalorder %v889, %v368
        %vm894 = vcmp.eq.s32.totalorder %v892, %v368
        %v895 = vsel %vm893, 1, 0
        %v896 = vsel %vm894, 1, 0
        %v897 = vcvt.s32.f32 %v895
        %v898 = vcvt.s32.f32 %v896
        %v899 = vpack.c.bf16 %v898, %v897
        %v900 = vadd.bf16 %v872, %v899
        %901 = vset.pattern.permute.xlu0 19
        %902 = vperm.xlu0 %901, %v360
        %v903 = vpop.permute.xlu0 %902
        %904 = vset.pattern.permute.xlu0 19
        %905 = vperm.xlu0 %904, %v361
        %v906 = vpop.permute.xlu0 %905
        %vm907 = vcmp.eq.s32.totalorder %v903, %v368
        %vm908 = vcmp.eq.s32.totalorder %v906, %v368
        %v909 = vsel %vm907, 1, 0
        %v910 = vsel %vm908, 1, 0
        %v911 = vcvt.s32.f32 %v909
        %v912 = vcvt.s32.f32 %v910
        %v913 = vpack.c.bf16 %v912, %v911
        %v914 = vadd.bf16 %v886, %v913
        %915 = vset.pattern.permute.xlu0 19
        %916 = vperm.xlu0 %915, %v362
        %v917 = vpop.permute.xlu0 %916
        %918 = vset.pattern.permute.xlu0 19
        %919 = vperm.xlu0 %918, %v363
        %v920 = vpop.permute.xlu0 %919
        %vm921 = vcmp.eq.s32.totalorder %v917, %v368
        %vm922 = vcmp.eq.s32.totalorder %v920, %v368
        %v923 = vsel %vm921, 1, 0
        %v924 = vsel %vm922, 1, 0
        %v925 = vcvt.s32.f32 %v923
        %v926 = vcvt.s32.f32 %v924
        %v927 = vpack.c.bf16 %v926, %v925
        %v928 = vadd.bf16 %v900, %v927
        %929 = vset.pattern.permute.xlu0 20
        %930 = vperm.xlu0 %929, %v360
        %v931 = vpop.permute.xlu0 %930
        %932 = vset.pattern.permute.xlu0 20
        %933 = vperm.xlu0 %932, %v361
        %v934 = vpop.permute.xlu0 %933
        %vm935 = vcmp.eq.s32.totalorder %v931, %v368
        %vm936 = vcmp.eq.s32.totalorder %v934, %v368
        %v937 = vsel %vm935, 1, 0
        %v938 = vsel %vm936, 1, 0
        %v939 = vcvt.s32.f32 %v937
        %v940 = vcvt.s32.f32 %v938
        %v941 = vpack.c.bf16 %v940, %v939
        %v942 = vadd.bf16 %v914, %v941
        %943 = vset.pattern.permute.xlu0 20
        %944 = vperm.xlu0 %943, %v362
        %v945 = vpop.permute.xlu0 %944
        %946 = vset.pattern.permute.xlu0 20
        %947 = vperm.xlu0 %946, %v363
        %v948 = vpop.permute.xlu0 %947
        %vm949 = vcmp.eq.s32.totalorder %v945, %v368
        %vm950 = vcmp.eq.s32.totalorder %v948, %v368
        %v951 = vsel %vm949, 1, 0
        %v952 = vsel %vm950, 1, 0
        %v953 = vcvt.s32.f32 %v951
        %v954 = vcvt.s32.f32 %v952
        %v955 = vpack.c.bf16 %v954, %v953
        %v956 = vadd.bf16 %v928, %v955
        %957 = vset.pattern.permute.xlu0 21
        %958 = vperm.xlu0 %957, %v360
        %v959 = vpop.permute.xlu0 %958
        %960 = vset.pattern.permute.xlu0 21
        %961 = vperm.xlu0 %960, %v361
        %v962 = vpop.permute.xlu0 %961
        %vm963 = vcmp.eq.s32.totalorder %v959, %v368
        %vm964 = vcmp.eq.s32.totalorder %v962, %v368
        %v965 = vsel %vm963, 1, 0
        %v966 = vsel %vm964, 1, 0
        %v967 = vcvt.s32.f32 %v965
        %v968 = vcvt.s32.f32 %v966
        %v969 = vpack.c.bf16 %v968, %v967
        %v970 = vadd.bf16 %v942, %v969
        %971 = vset.pattern.permute.xlu0 21
        %972 = vperm.xlu0 %971, %v362
        %v973 = vpop.permute.xlu0 %972
        %974 = vset.pattern.permute.xlu0 21
        %975 = vperm.xlu0 %974, %v363
        %v976 = vpop.permute.xlu0 %975
        %vm977 = vcmp.eq.s32.totalorder %v973, %v368
        %vm978 = vcmp.eq.s32.totalorder %v976, %v368
        %v979 = vsel %vm977, 1, 0
        %v980 = vsel %vm978, 1, 0
        %v981 = vcvt.s32.f32 %v979
        %v982 = vcvt.s32.f32 %v980
        %v983 = vpack.c.bf16 %v982, %v981
        %v984 = vadd.bf16 %v956, %v983
        %985 = vset.pattern.permute.xlu0 22
        %986 = vperm.xlu0 %985, %v360
        %v987 = vpop.permute.xlu0 %986
        %988 = vset.pattern.permute.xlu0 22
        %989 = vperm.xlu0 %988, %v361
        %v990 = vpop.permute.xlu0 %989
        %vm991 = vcmp.eq.s32.totalorder %v987, %v368
        %vm992 = vcmp.eq.s32.totalorder %v990, %v368
        %v993 = vsel %vm991, 1, 0
        %v994 = vsel %vm992, 1, 0
        %v995 = vcvt.s32.f32 %v993
        %v996 = vcvt.s32.f32 %v994
        %v997 = vpack.c.bf16 %v996, %v995
        %v998 = vadd.bf16 %v970, %v997
        %999 = vset.pattern.permute.xlu0 22
        %1000 = vperm.xlu0 %999, %v362
        %v1001 = vpop.permute.xlu0 %1000
        %1002 = vset.pattern.permute.xlu0 22
        %1003 = vperm.xlu0 %1002, %v363
        %v1004 = vpop.permute.xlu0 %1003
        %vm1005 = vcmp.eq.s32.totalorder %v1001, %v368
        %vm1006 = vcmp.eq.s32.totalorder %v1004, %v368
        %v1007 = vsel %vm1005, 1, 0
        %v1008 = vsel %vm1006, 1, 0
        %v1009 = vcvt.s32.f32 %v1007
        %v1010 = vcvt.s32.f32 %v1008
        %v1011 = vpack.c.bf16 %v1010, %v1009
        %v1012 = vadd.bf16 %v984, %v1011
        %1013 = vset.pattern.permute.xlu0 23
        %1014 = vperm.xlu0 %1013, %v360
        %v1015 = vpop.permute.xlu0 %1014
        %1016 = vset.pattern.permute.xlu0 23
        %1017 = vperm.xlu0 %1016, %v361
        %v1018 = vpop.permute.xlu0 %1017
        %vm1019 = vcmp.eq.s32.totalorder %v1015, %v368
        %vm1020 = vcmp.eq.s32.totalorder %v1018, %v368
        %v1021 = vsel %vm1019, 1, 0
        %v1022 = vsel %vm1020, 1, 0
        %v1023 = vcvt.s32.f32 %v1021
        %v1024 = vcvt.s32.f32 %v1022
        %v1025 = vpack.c.bf16 %v1024, %v1023
        %v1026 = vadd.bf16 %v998, %v1025
        %1027 = vset.pattern.permute.xlu0 23
        %1028 = vperm.xlu0 %1027, %v362
        %v1029 = vpop.permute.xlu0 %1028
        %1030 = vset.pattern.permute.xlu0 23
        %1031 = vperm.xlu0 %1030, %v363
        %v1032 = vpop.permute.xlu0 %1031
        %vm1033 = vcmp.eq.s32.totalorder %v1029, %v368
        %vm1034 = vcmp.eq.s32.totalorder %v1032, %v368
        %v1035 = vsel %vm1033, 1, 0
        %v1036 = vsel %vm1034, 1, 0
        %v1037 = vcvt.s32.f32 %v1035
        %v1038 = vcvt.s32.f32 %v1036
        %v1039 = vpack.c.bf16 %v1038, %v1037
        %v1040 = vadd.bf16 %v1012, %v1039
        %1041 = vset.pattern.permute.xlu0 24
        %1042 = vperm.xlu0 %1041, %v360
        %v1043 = vpop.permute.xlu0 %1042
        %1044 = vset.pattern.permute.xlu0 24
        %1045 = vperm.xlu0 %1044, %v361
        %v1046 = vpop.permute.xlu0 %1045
        %vm1047 = vcmp.eq.s32.totalorder %v1043, %v368
        %vm1048 = vcmp.eq.s32.totalorder %v1046, %v368
        %v1049 = vsel %vm1047, 1, 0
        %v1050 = vsel %vm1048, 1, 0
        %v1051 = vcvt.s32.f32 %v1049
        %v1052 = vcvt.s32.f32 %v1050
        %v1053 = vpack.c.bf16 %v1052, %v1051
        %v1054 = vadd.bf16 %v1026, %v1053
        %1055 = vset.pattern.permute.xlu0 24
        %1056 = vperm.xlu0 %1055, %v362
        %v1057 = vpop.permute.xlu0 %1056
        %1058 = vset.pattern.permute.xlu0 24
        %1059 = vperm.xlu0 %1058, %v363
        %v1060 = vpop.permute.xlu0 %1059
        %vm1061 = vcmp.eq.s32.totalorder %v1057, %v368
        %vm1062 = vcmp.eq.s32.totalorder %v1060, %v368
        %v1063 = vsel %vm1061, 1, 0
        %v1064 = vsel %vm1062, 1, 0
        %v1065 = vcvt.s32.f32 %v1063
        %v1066 = vcvt.s32.f32 %v1064
        %v1067 = vpack.c.bf16 %v1066, %v1065
        %v1068 = vadd.bf16 %v1040, %v1067
        %1069 = vset.pattern.permute.xlu0 25
        %1070 = vperm.xlu0 %1069, %v360
        %v1071 = vpop.permute.xlu0 %1070
        %1072 = vset.pattern.permute.xlu0 25
        %1073 = vperm.xlu0 %1072, %v361
        %v1074 = vpop.permute.xlu0 %1073
        %vm1075 = vcmp.eq.s32.totalorder %v1071, %v368
        %vm1076 = vcmp.eq.s32.totalorder %v1074, %v368
        %v1077 = vsel %vm1075, 1, 0
        %v1078 = vsel %vm1076, 1, 0
        %v1079 = vcvt.s32.f32 %v1077
        %v1080 = vcvt.s32.f32 %v1078
        %v1081 = vpack.c.bf16 %v1080, %v1079
        %v1082 = vadd.bf16 %v1054, %v1081
        %1083 = vset.pattern.permute.xlu0 25
        %1084 = vperm.xlu0 %1083, %v362
        %v1085 = vpop.permute.xlu0 %1084
        %1086 = vset.pattern.permute.xlu0 25
        %1087 = vperm.xlu0 %1086, %v363
        %v1088 = vpop.permute.xlu0 %1087
        %vm1089 = vcmp.eq.s32.totalorder %v1085, %v368
        %vm1090 = vcmp.eq.s32.totalorder %v1088, %v368
        %v1091 = vsel %vm1089, 1, 0
        %v1092 = vsel %vm1090, 1, 0
        %v1093 = vcvt.s32.f32 %v1091
        %v1094 = vcvt.s32.f32 %v1092
        %v1095 = vpack.c.bf16 %v1094, %v1093
        %v1096 = vadd.bf16 %v1068, %v1095
        %1097 = vset.pattern.permute.xlu0 26
        %1098 = vperm.xlu0 %1097, %v360
        %v1099 = vpop.permute.xlu0 %1098
        %1100 = vset.pattern.permute.xlu0 26
        %1101 = vperm.xlu0 %1100, %v361
        %v1102 = vpop.permute.xlu0 %1101
        %vm1103 = vcmp.eq.s32.totalorder %v1099, %v368
        %vm1104 = vcmp.eq.s32.totalorder %v1102, %v368
        %v1105 = vsel %vm1103, 1, 0
        %v1106 = vsel %vm1104, 1, 0
        %v1107 = vcvt.s32.f32 %v1105
        %v1108 = vcvt.s32.f32 %v1106
        %v1109 = vpack.c.bf16 %v1108, %v1107
        %v1110 = vadd.bf16 %v1082, %v1109
        %1111 = vset.pattern.permute.xlu0 26
        %1112 = vperm.xlu0 %1111, %v362
        %v1113 = vpop.permute.xlu0 %1112
        %1114 = vset.pattern.permute.xlu0 26
        %1115 = vperm.xlu0 %1114, %v363
        %v1116 = vpop.permute.xlu0 %1115
        %vm1117 = vcmp.eq.s32.totalorder %v1113, %v368
        %vm1118 = vcmp.eq.s32.totalorder %v1116, %v368
        %v1119 = vsel %vm1117, 1, 0
        %v1120 = vsel %vm1118, 1, 0
        %v1121 = vcvt.s32.f32 %v1119
        %v1122 = vcvt.s32.f32 %v1120
        %v1123 = vpack.c.bf16 %v1122, %v1121
        %v1124 = vadd.bf16 %v1096, %v1123
        %1125 = vset.pattern.permute.xlu0 27
        %1126 = vperm.xlu0 %1125, %v360
        %v1127 = vpop.permute.xlu0 %1126
        %1128 = vset.pattern.permute.xlu0 27
        %1129 = vperm.xlu0 %1128, %v361
        %v1130 = vpop.permute.xlu0 %1129
        %vm1131 = vcmp.eq.s32.totalorder %v1127, %v368
        %vm1132 = vcmp.eq.s32.totalorder %v1130, %v368
        %v1133 = vsel %vm1131, 1, 0
        %v1134 = vsel %vm1132, 1, 0
        %v1135 = vcvt.s32.f32 %v1133
        %v1136 = vcvt.s32.f32 %v1134
        %v1137 = vpack.c.bf16 %v1136, %v1135
        %v1138 = vadd.bf16 %v1110, %v1137
        %1139 = vset.pattern.permute.xlu0 27
        %1140 = vperm.xlu0 %1139, %v362
        %v1141 = vpop.permute.xlu0 %1140
        %1142 = vset.pattern.permute.xlu0 27
        %1143 = vperm.xlu0 %1142, %v363
        %v1144 = vpop.permute.xlu0 %1143
        %vm1145 = vcmp.eq.s32.totalorder %v1141, %v368
        %vm1146 = vcmp.eq.s32.totalorder %v1144, %v368
        %v1147 = vsel %vm1145, 1, 0
        %v1148 = vsel %vm1146, 1, 0
        %v1149 = vcvt.s32.f32 %v1147
        %v1150 = vcvt.s32.f32 %v1148
        %v1151 = vpack.c.bf16 %v1150, %v1149
        %v1152 = vadd.bf16 %v1124, %v1151
        %1153 = vset.pattern.permute.xlu0 28
        %1154 = vperm.xlu0 %1153, %v360
        %v1155 = vpop.permute.xlu0 %1154
        %1156 = vset.pattern.permute.xlu0 28
        %1157 = vperm.xlu0 %1156, %v361
        %v1158 = vpop.permute.xlu0 %1157
        %vm1159 = vcmp.eq.s32.totalorder %v1155, %v368
        %vm1160 = vcmp.eq.s32.totalorder %v1158, %v368
        %v1161 = vsel %vm1159, 1, 0
        %v1162 = vsel %vm1160, 1, 0
        %v1163 = vcvt.s32.f32 %v1161
        %v1164 = vcvt.s32.f32 %v1162
        %v1165 = vpack.c.bf16 %v1164, %v1163
        %v1166 = vadd.bf16 %v1138, %v1165
        %1167 = vset.pattern.permute.xlu0 28
        %1168 = vperm.xlu0 %1167, %v362
        %v1169 = vpop.permute.xlu0 %1168
        %1170 = vset.pattern.permute.xlu0 28
        %1171 = vperm.xlu0 %1170, %v363
        %v1172 = vpop.permute.xlu0 %1171
        %vm1173 = vcmp.eq.s32.totalorder %v1169, %v368
        %vm1174 = vcmp.eq.s32.totalorder %v1172, %v368
        %v1175 = vsel %vm1173, 1, 0
        %v1176 = vsel %vm1174, 1, 0
        %v1177 = vcvt.s32.f32 %v1175
        %v1178 = vcvt.s32.f32 %v1176
        %v1179 = vpack.c.bf16 %v1178, %v1177
        %v1180 = vadd.bf16 %v1152, %v1179
        %1181 = vset.pattern.permute.xlu0 29
        %1182 = vperm.xlu0 %1181, %v360
        %v1183 = vpop.permute.xlu0 %1182
        %1184 = vset.pattern.permute.xlu0 29
        %1185 = vperm.xlu0 %1184, %v361
        %v1186 = vpop.permute.xlu0 %1185
        %vm1187 = vcmp.eq.s32.totalorder %v1183, %v368
        %vm1188 = vcmp.eq.s32.totalorder %v1186, %v368
        %v1189 = vsel %vm1187, 1, 0
        %v1190 = vsel %vm1188, 1, 0
        %v1191 = vcvt.s32.f32 %v1189
        %v1192 = vcvt.s32.f32 %v1190
        %v1193 = vpack.c.bf16 %v1192, %v1191
        %v1194 = vadd.bf16 %v1166, %v1193
        %1195 = vset.pattern.permute.xlu0 29
        %1196 = vperm.xlu0 %1195, %v362
        %v1197 = vpop.permute.xlu0 %1196
        %1198 = vset.pattern.permute.xlu0 29
        %1199 = vperm.xlu0 %1198, %v363
        %v1200 = vpop.permute.xlu0 %1199
        %vm1201 = vcmp.eq.s32.totalorder %v1197, %v368
        %vm1202 = vcmp.eq.s32.totalorder %v1200, %v368
        %v1203 = vsel %vm1201, 1, 0
        %v1204 = vsel %vm1202, 1, 0
        %v1205 = vcvt.s32.f32 %v1203
        %v1206 = vcvt.s32.f32 %v1204
        %v1207 = vpack.c.bf16 %v1206, %v1205
        %v1208 = vadd.bf16 %v1180, %v1207
        %1209 = vset.pattern.permute.xlu0 30
        %1210 = vperm.xlu0 %1209, %v360
        %v1211 = vpop.permute.xlu0 %1210
        %1212 = vset.pattern.permute.xlu0 30
        %1213 = vperm.xlu0 %1212, %v361
        %v1214 = vpop.permute.xlu0 %1213
        %vm1215 = vcmp.eq.s32.totalorder %v1211, %v368
        %vm1216 = vcmp.eq.s32.totalorder %v1214, %v368
        %v1217 = vsel %vm1215, 1, 0
        %v1218 = vsel %vm1216, 1, 0
        %v1219 = vcvt.s32.f32 %v1217
        %v1220 = vcvt.s32.f32 %v1218
        %v1221 = vpack.c.bf16 %v1220, %v1219
        %v1222 = vadd.bf16 %v1194, %v1221
        %1223 = vset.pattern.permute.xlu0 30
        %1224 = vperm.xlu0 %1223, %v362
        %v1225 = vpop.permute.xlu0 %1224
        %1226 = vset.pattern.permute.xlu0 30
        %1227 = vperm.xlu0 %1226, %v363
        %v1228 = vpop.permute.xlu0 %1227
        %vm1229 = vcmp.eq.s32.totalorder %v1225, %v368
        %vm1230 = vcmp.eq.s32.totalorder %v1228, %v368
        %v1231 = vsel %vm1229, 1, 0
        %v1232 = vsel %vm1230, 1, 0
        %v1233 = vcvt.s32.f32 %v1231
        %v1234 = vcvt.s32.f32 %v1232
        %v1235 = vpack.c.bf16 %v1234, %v1233
        %v1236 = vadd.bf16 %v1208, %v1235
        %1237 = vset.pattern.permute.xlu0 31
        %1238 = vperm.xlu0 %1237, %v360
        %v1239 = vpop.permute.xlu0 %1238
        %1240 = vset.pattern.permute.xlu0 31
        %1241 = vperm.xlu0 %1240, %v361
        %v1242 = vpop.permute.xlu0 %1241
        %vm1243 = vcmp.eq.s32.totalorder %v1239, %v368
        %vm1244 = vcmp.eq.s32.totalorder %v1242, %v368
        %v1245 = vsel %vm1243, 1, 0
        %v1246 = vsel %vm1244, 1, 0
        %v1247 = vcvt.s32.f32 %v1245
        %v1248 = vcvt.s32.f32 %v1246
        %v1249 = vpack.c.bf16 %v1248, %v1247
        %v1250 = vadd.bf16 %v1222, %v1249
        %1251 = vset.pattern.permute.xlu0 31
        %1252 = vperm.xlu0 %1251, %v362
        %v1253 = vpop.permute.xlu0 %1252
        %1254 = vset.pattern.permute.xlu0 31
        %1255 = vperm.xlu0 %1254, %v363
        %v1256 = vpop.permute.xlu0 %1255
        %vm1257 = vcmp.eq.s32.totalorder %v1253, %v368
        %vm1258 = vcmp.eq.s32.totalorder %v1256, %v368
        %v1259 = vsel %vm1257, 1, 0
        %v1260 = vsel %vm1258, 1, 0
        %v1261 = vcvt.s32.f32 %v1259
        %v1262 = vcvt.s32.f32 %v1260
        %v1263 = vpack.c.bf16 %v1262, %v1261
        %v1264 = vadd.bf16 %v1236, %v1263
        %v1265 = vld [vmem:[#allocation2] sm:$0xff]
        %v1266 = vld [vmem:[#allocation2 + $0x8] sm:$0xff]
        %v1267 = vld [vmem:[#allocation2 + $0x10] sm:$0xff]
        %v1268 = vld [vmem:[#allocation2 + $0x18] sm:$0xff]
        %v1269 = vld [vmem:[%s306] sm:$0xf]
        %v1270 = vld [vmem:[%s306 + $0x4] sm:$0xf]
        %v1271 = vld [vmem:[%s306 + $0x8] sm:$0xf]
        %v1272 = vld [vmem:[%s306 + $0xc] sm:$0xf]
        %v1273 = vld [vmem:[%s306 + $0x10] sm:$0xf]
        %v1274 = vld [vmem:[%s306 + $0x14] sm:$0xf]
        %v1275 = vld [vmem:[%s306 + $0x18] sm:$0xf]
        %v1276 = vld [vmem:[%s306 + $0x1c] sm:$0xf]
        %v1277 = vld [vmem:[%s306 + $0x20] sm:$0xf]
        %v1278 = vld [vmem:[%s306 + $0x24] sm:$0xf]
        %v1279 = vld [vmem:[%s306 + $0x28] sm:$0xf]
        %v1280 = vld [vmem:[%s306 + $0x2c] sm:$0xf]
        %v1281 = vld [vmem:[%s306 + $0x30] sm:$0xf]
        %v1282 = vld [vmem:[%s306 + $0x34] sm:$0xf]
        %v1283 = vld [vmem:[%s306 + $0x38] sm:$0xf]
        %v1284 = vld [vmem:[%s306 + $0x3c] sm:$0xf]
        %v1301 = vunpack.c.l.b16 %v1269
        %v1302 = vunpack.c.l.b16 %v1270
        %v1303 = vunpack.c.l.b16 %v1271
        %v1304 = vunpack.c.l.b16 %v1272
        %v1305 = vunpack.c.l.b16 %v1273
        %v1306 = vunpack.c.l.b16 %v1274
        %v1307 = vunpack.c.l.b16 %v1275
        %v1308 = vunpack.c.l.b16 %v1276
        %v1309 = vunpack.c.l.b16 %v1277
        %v1310 = vunpack.c.l.b16 %v1278
        %v1311 = vunpack.c.l.b16 %v1279
        %v1312 = vunpack.c.l.b16 %v1280
        %v1313 = vunpack.c.l.b16 %v1281
        %v1314 = vunpack.c.l.b16 %v1282
        %v1315 = vunpack.c.l.b16 %v1283
        %v1316 = vunpack.c.l.b16 %v1284
        %v1317 = vpack.c.b16 %v1302, %v1301
        %v1318 = vpack.c.b16 %v1304, %v1303
        %v1319 = vpack.c.b16 %v1306, %v1305
        %v1320 = vpack.c.b16 %v1308, %v1307
        %v1321 = vpack.c.b16 %v1310, %v1309
        %v1322 = vpack.c.b16 %v1312, %v1311
        %v1323 = vpack.c.b16 %v1314, %v1313
        %v1324 = vpack.c.b16 %v1316, %v1315
        %1333 = vmatprep.subr.bf16.mxu0 0
        %1334 = vmatpush1.bf16.msra.mxu0 %v1317
        %1335 = vmatprep.subr.bf16.mxu0 0
        %1336 = vmatpush1.bf16.msra.mxu0 %v1318
        %1337 = vmatprep.subr.bf16.mxu0 0
        %1338 = vmatpush1.bf16.msra.mxu0 %v1319
        %1339 = vmatprep.subr.bf16.mxu0 0
        %1340 = vmatpush1.bf16.msra.mxu0 %v1320
        %1341 = vmatprep.subr.bf16.mxu0 0
        %1342 = vmatpush1.bf16.msra.mxu0 %v1321
        %1343 = vmatprep.subr.bf16.mxu0 0
        %1344 = vmatpush1.bf16.msra.mxu0 %v1322
        %1345 = vmatprep.subr.bf16.mxu0 0
        %1346 = vmatpush1.bf16.msra.mxu0 %v1323
        %1347 = vmatprep.subr.bf16.mxu0 0
        %1348 = vmatpush1.bf16.msra.mxu0 %v1324
        %1349 = vmatprep.subr.bf16.mxu0 0
        %1350 = vmatpush1.bf16.msra.mxu0 0
        %1351 = vmatprep.subr.bf16.mxu0 0
        %1352 = vmatpush1.bf16.msra.mxu0 0
        %1353 = vmatprep.subr.bf16.mxu0 0
        %1354 = vmatpush1.bf16.msra.mxu0 0
        %1355 = vmatprep.subr.bf16.mxu0 0
        %1356 = vmatpush1.bf16.msra.mxu0 0
        %1357 = vmatprep.subr.bf16.mxu0 0
        %1358 = vmatpush1.bf16.msra.mxu0 0
        %1359 = vmatprep.subr.bf16.mxu0 0
        %1360 = vmatpush1.bf16.msra.mxu0 0
        %1361 = vmatprep.subr.bf16.mxu0 0
        %1362 = vmatpush1.bf16.msra.mxu0 0
        %1363 = vmatprep.subr.bf16.mxu0 0
        %1364 = vmatpush1.bf16.msra.mxu0 0
        %1365 = vmatprep.mubr.bf16.mxu0 0
        %1366 = vmatmul.mubr.bf16.gmra.mrb[0].mxu0 %v1250
        %v1367 = vpop.f32.mrb[0].mxu0
        %v1368 = vadd.f32 0.0, %v1367
        %v1369 = vpop.f32.mrb[0].mxu0
        %v1370 = vpop.f32.mrb[0].mxu0
        %v1371 = vadd.f32 0.0, %v1370
        %v1372 = vpop.f32.mrb[0].mxu0
        %1373 = vmatprep.mubr.bf16.mxu0 0
        %1374 = vmatmul.mubr.bf16.gmra.mrb[0].mxu0 %v1264
        %v1375 = vpop.f32.mrb[0].mxu0
        %v1376 = vadd.f32 0.0, %v1375
        %v1377 = vpop.f32.mrb[0].mxu0
        %v1378 = vpop.f32.mrb[0].mxu0
        %v1379 = vadd.f32 0.0, %v1378
        %v1380 = vpop.f32.mrb[0].mxu0
        %1381 = vdwg.mxu0
        %v1382 = vadd.f32 %v1265, %v1368
        %v1383 = vadd.f32 %v1266, %v1371
        %v1384 = vadd.f32 %v1267, %v1376
        %v1385 = vadd.f32 %v1268, %v1379
        %1386 = vst [vmem:[#allocation2] sm:$0xff] %v1382
        %1387 = vst [vmem:[#allocation2 + $0x8] sm:$0xff] %v1383
        %1388 = vst [vmem:[#allocation2 + $0x10] sm:$0xff] %v1384
        %1389 = vst [vmem:[#allocation2 + $0x18] sm:$0xff] %v1385
        %p1390 = scmp.eq.s32.totalorder %s31, 2
        // Predicated region
        $region61: #{tpu_custom_call.1} parent=39 // pred_check
          %p1391 = pneg %p1390
        $region62: #{tpu_custom_call.1} parent=39 // pred_check_branch
          %1393 = sbr.rel (%p1391) target = $region64
        $region63: #{tpu_custom_call.1} parent=39 // pred_region
          %v1394 = vld [vmem:[#allocation2] sm:$0xff]
          %v1395 = vld [vmem:[#allocation2 + $0x8] sm:$0xff]
          %v1396 = vld [vmem:[#allocation2 + $0x10] sm:$0xff]
          %v1397 = vld [vmem:[#allocation2 + $0x18] sm:$0xff]
          %v1398 = vmul.f32 %v1394, 0.125
          %v1399 = vmul.f32 %v1395, 0.125
          %v1400 = vmul.f32 %v1396, 0.125
          %v1401 = vmul.f32 %v1397, 0.125
          %v1402 = vld [vmem:[#allocation9] sm:$0xff]
          %v1403 = vld [vmem:[#allocation9 + $0x8] sm:$0xff]
          %v1404 = vld [vmem:[#allocation9 + $0x10] sm:$0xff]
          %v1405 = vld [vmem:[#allocation9 + $0x18] sm:$0xff]
          %v1406 = vld [vmem:[#allocation9 + $0x20] sm:$0xff]
          %v1407 = vld [vmem:[#allocation9 + $0x28] sm:$0xff]
          %v1408 = vld [vmem:[#allocation9 + $0x30] sm:$0xff]
          %v1409 = vld [vmem:[#allocation9 + $0x38] sm:$0xff]
          %v1410 = vld [vmem:[#allocation9 + $0x40] sm:$0xff]
          %v1411 = vld [vmem:[#allocation9 + $0x48] sm:$0xff]
          %v1412 = vld [vmem:[#allocation9 + $0x50] sm:$0xff]
          %v1413 = vld [vmem:[#allocation9 + $0x58] sm:$0xff]
          %v1414 = vld [vmem:[#allocation9 + $0x60] sm:$0xff]
          %v1415 = vld [vmem:[#allocation9 + $0x68] sm:$0xff]
          %v1416 = vld [vmem:[#allocation9 + $0x70] sm:$0xff]
          %v1417 = vld [vmem:[#allocation9 + $0x78] sm:$0xff]
          %v1418 = vld [vmem:[#allocation9 + $0x80] sm:$0xff]
          %v1419 = vld [vmem:[#allocation9 + $0x88] sm:$0xff]
          %v1420 = vld [vmem:[#allocation9 + $0x90] sm:$0xff]
          %v1421 = vld [vmem:[#allocation9 + $0x98] sm:$0xff]
          %v1422 = vld [vmem:[#allocation9 + $0xa0] sm:$0xff]
          %v1423 = vld [vmem:[#allocation9 + $0xa8] sm:$0xff]
          %v1424 = vld [vmem:[#allocation9 + $0xb0] sm:$0xff]
          %v1425 = vld [vmem:[#allocation9 + $0xb8] sm:$0xff]
          %v1426 = vld [vmem:[#allocation9 + $0xc0] sm:$0xff]
          %v1427 = vld [vmem:[#allocation9 + $0xc8] sm:$0xff]
          %v1428 = vld [vmem:[#allocation9 + $0xd0] sm:$0xff]
          %v1429 = vld [vmem:[#allocation9 + $0xd8] sm:$0xff]
          %v1430 = vld [vmem:[#allocation9 + $0xe0] sm:$0xff]
          %v1431 = vld [vmem:[#allocation9 + $0xe8] sm:$0xff]
          %v1432 = vld [vmem:[#allocation9 + $0xf0] sm:$0xff]
          %v1433 = vld [vmem:[#allocation9 + $0xf8] sm:$0xff]
          %v1434 = vld [vmem:[%s4] sm:$0x1]
          %v1436 = vlaneseq
          %v1437 = vshrl.u32 %v1436, 7
          %v1438 = vsub.s32 0, %v1437
          %v1439 = vrot.slane %v1434, %v1438
          %1441 = vmatprep.subr.mxu0 0.0
          %1442 = vmatpush1.msra.mxu0 %v1402
          %1443 = vmatprep.subr.mxu0 0.0
          %1444 = vmatpush1.msra.mxu0 %v1403
          %1445 = vmatprep.subr.mxu0 0.0
          %1446 = vmatpush1.msra.mxu0 %v1404
          %1447 = vmatprep.subr.mxu0 0.0
          %1448 = vmatpush1.msra.mxu0 %v1405
          %1449 = vmatprep.subr.mxu0 0.0
          %1450 = vmatpush1.msra.mxu0 %v1406
          %1451 = vmatprep.subr.mxu0 0.0
          %1452 = vmatpush1.msra.mxu0 %v1407
          %1453 = vmatprep.subr.mxu0 0.0
          %1454 = vmatpush1.msra.mxu0 %v1408
          %1455 = vmatprep.subr.mxu0 0.0
          %1456 = vmatpush1.msra.mxu0 %v1409
          %1457 = vmatprep.subr.mxu0 0.0
          %1458 = vmatpush1.msra.mxu0 %v1410
          %1459 = vmatprep.subr.mxu0 0.0
          %1460 = vmatpush1.msra.mxu0 %v1411
          %1461 = vmatprep.subr.mxu0 0.0
          %1462 = vmatpush1.msra.mxu0 %v1412
          %1463 = vmatprep.subr.mxu0 0.0
          %1464 = vmatpush1.msra.mxu0 %v1413
          %1465 = vmatprep.subr.mxu0 0.0
          %1466 = vmatpush1.msra.mxu0 %v1414
          %1467 = vmatprep.subr.mxu0 0.0
          %1468 = vmatpush1.msra.mxu0 %v1415
          %1469 = vmatprep.subr.mxu0 0.0
          %1470 = vmatpush1.msra.mxu0 %v1416
          %1471 = vmatprep.subr.mxu0 0.0
          %1472 = vmatpush1.msra.mxu0 %v1417
          %1473 = vmatprep.subr.mxu0 0.0
          %1474 = vmatpush1.msra.mxu0 %v1418
          %1475 = vmatprep.subr.mxu0 0.0
          %1476 = vmatpush1.msra.mxu0 %v1419
          %1477 = vmatprep.subr.mxu0 0.0
          %1478 = vmatpush1.msra.mxu0 %v1420
          %1479 = vmatprep.subr.mxu0 0.0
          %1480 = vmatpush1.msra.mxu0 %v1421
          %1481 = vmatprep.subr.mxu0 0.0
          %1482 = vmatpush1.msra.mxu0 %v1422
          %1483 = vmatprep.subr.mxu0 0.0
          %1484 = vmatpush1.msra.mxu0 %v1423
          %1485 = vmatprep.subr.mxu0 0.0
          %1486 = vmatpush1.msra.mxu0 %v1424
          %1487 = vmatprep.subr.mxu0 0.0
          %1488 = vmatpush1.msra.mxu0 %v1425
          %1489 = vmatprep.subr.mxu0 0.0
          %1490 = vmatpush1.msra.mxu0 %v1426
          %1491 = vmatprep.subr.mxu0 0.0
          %1492 = vmatpush1.msra.mxu0 %v1427
          %1493 = vmatprep.subr.mxu0 0.0
          %1494 = vmatpush1.msra.mxu0 %v1428
          %1495 = vmatprep.subr.mxu0 0.0
          %1496 = vmatpush1.msra.mxu0 %v1429
          %1497 = vmatprep.subr.mxu0 0.0
          %1498 = vmatpush1.msra.mxu0 %v1430
          %1499 = vmatprep.subr.mxu0 0.0
          %1500 = vmatpush1.msra.mxu0 %v1431
          %1501 = vmatprep.subr.mxu0 0.0
          %1502 = vmatpush1.msra.mxu0 %v1432
          %1503 = vmatprep.subr.mxu0 0.0
          %1504 = vmatpush1.msra.mxu0 %v1433
          %1505 = vmatprep.mubr.f32.mxu0 %v1400
          %1506 = vmatmul.mubr.f32.gmra.mrb[0].mxu0 %v1398
          %v1507 = vpop.f32.mrb[0].mxu0
          %v1508 = vadd.f32 %v1439, %v1507
          %v1509 = vpop.f32.mrb[0].mxu0
          %1510 = vmatprep.mubr.f32.mxu0 %v1401
          %1511 = vmatmul.mubr.f32.gmra.mrb[0].mxu0 %v1399
          %v1512 = vpop.f32.mrb[0].mxu0
          %v1513 = vadd.f32 %v1439, %v1512
          %v1514 = vpop.f32.mrb[0].mxu0
          %1515 = vdwg.mxu0
          %1516 = vst [vmem:[%s346] sm:$0xff] %v1508
          %1517 = vst [vmem:[%s346 + $0x8] sm:$0xff] %v1513
        $region64: #{tpu_custom_call.1} parent=39 // pred_fallthru
          _
        %s1518 = sand.u32 %s166, 1
        %s1519 = scalar_lea.sflag [#allocation5], %s1518
        %s1520 = sand.u32 %s166, 1
        %s1521 = smul.addr %s1520, 16
        %s1522 = scalar_lea.vmem [#allocation11], %s1521
        // Predicated region
        $region65: #{tpu_custom_call.1} parent=39 // pred_check
          %p1523 = pneg %p176
        $region66: #{tpu_custom_call.1} parent=39 // pred_check_branch
          %1525 = sbr.rel (%p1523) target = $region68
        $region67: #{tpu_custom_call.1} parent=39 // pred_region
          %s1526 = smul.u32 2, %s30
          %s1528 = ssub.s32 256, 256
          %1529 = vsyncadd %s1519, %s1528
          %s1530 = smul.addr %s1526, 128
          %s1531 = scalar_lea.hbm %s5, %s1530
          %s1532 = sshll.u32 %s1522, 4
          %s1533 = int_to_ptr.vmem [resolvable:$true] %s1532
          %1538 = dma.vmem_to_hbm [thread:$0]  %s1533, 256, %s1531, %s1519, 128, 128, 8
        $region68: #{tpu_custom_call.1} parent=39 // pred_fallthru
          _
      $region40: #{tpu_custom_call.1} parent=5 // pred_fallthru
        _
      %p1539 = scmp.le.s32.totalorder 2, %s21
      // Predicated region
      $region69: #{tpu_custom_call.1} parent=5 // pred_check
        %p1540 = pneg %p1539
      $region70: #{tpu_custom_call.1} parent=5 // pred_check_branch
        %1542 = sbr.rel (%p1540) target = $region72
      $region71: #{tpu_custom_call.1} parent=5 // pred_region
        %s1543 = ssub.s32 %s21, 2
        // Predicated region
        $region73: #{tpu_custom_call.1} parent=71 // pred_check
          %p1544 = pneg %p182
        $region74: #{tpu_custom_call.1} parent=71 // pred_check_branch
          %1546 = sbr.rel (%p1544) target = $region76
        $region75: #{tpu_custom_call.1} parent=71 // pred_region
          %s1547 = sand.u32 %s167, 1
          %s1548 = scalar_lea.sflag [#allocation5], %s1547
          %s1549 = sand.u32 %s167, 1
          %s1550 = smul.addr %s1549, 16
          %s1551 = scalar_lea.vmem [#allocation11], %s1550
          %1552 = dma.done %s1548, 256
        $region76: #{tpu_custom_call.1} parent=71 // pred_fallthru
          _
      $region72: #{tpu_custom_call.1} parent=5 // pred_fallthru
        _
    $region6: #{tpu_custom_call.1} parent=1 // loop_footer
      %s25 = sadd.s32 1, %s21
    $region7: #{tpu_custom_call.1} parent=1 // loop_footer_branch
      %20 = sbr.rel target = $region3
    $region8: #{tpu_custom_call.1} parent=1 // loop_exit
      _
    %1553 = vsyncpa [#allocation4], 1
    %s1554 = scalar_lea.sflag [#allocation4], 1
    %1555 = vsyncpa %s1554, 1
    %1556 = vsyncpa [#allocation7], 1
    %s1557 = scalar_lea.sflag [#allocation7], 1
    %1558 = vsyncpa %s1557, 1
    %1559 = vsyncpa [#allocation10], 1
    %1560 = vsyncpa [#allocation5], 1
    %s1561 = scalar_lea.sflag [#allocation5], 1
    %1562 = vsyncpa %s1561, 1

</llo_original>
